<compile_context>
chip_gen: v7x
topology: tpu7x:2x2x1
jax: 0.10.0
libtpu: 0.0.40
codegen_flags: <defaults>
</compile_context>

<pallas_src>
import functools

import jax
import jax.numpy as jnp
import numpy as np
from jax.experimental import pallas as pl
from jax.experimental.pallas import tpu as pltpu


def _round_up(x, m):
    return ((x + m - 1) // m) * m


def _num_tensorcores_per_chip():
    """2 on v7x (2 TensorCores/chip); 1 elsewhere (v4/v5e/v6e Pallas grid = one TC)."""
    try:
        kind = (getattr(jax.devices()[0], "device_kind", "") or "").lower()
    except Exception:
        return 1
    return 2 if "v7" in kind else 1


def _pick_batch_block(batch, num_heads, seq_q, seq_k, num_tensorcores,
                      score_budget_bytes=8 * 1024 * 1024):
    """Batch elements per grid step.

    Single-TC chips: the grid is a serial loop, so take the whole batch in one step
    (max MXU fill, no per-step pipeline overhead).  2-TC chips: keep >= num_tc steps
    so the 'parallel' axis can be sharded.  Both cases: shrink until the f32
    score + prob tiles (quadratic in num_heads*bblk) fit the VMEM budget.
    """
    def score_bytes(b):
        return 2 * (num_heads * b * seq_q) * (num_heads * b * seq_k) * 4

    if num_tensorcores >= 2 and batch >= num_tensorcores:
        start = batch // num_tensorcores
    else:
        start = batch
    for cand in range(start, 0, -1):
        if batch % cand == 0 and score_bytes(cand) <= score_budget_bytes:
            return cand
    return 1


def _estimate_vmem_bytes(rows_q, rows_k, e, e_pad, s_pad, h, mxu_bytes, need_weights):
    f32 = 4
    total = 2 * (rows_q + 2 * rows_k) * e * mxu_bytes                     # q/k/v blocks (x2 buf)
    total += 2 * rows_q * (e_pad + (s_pad if need_weights else 0)) * f32  # output blocks
    total += 2 * (e * (3 * e + e_pad) * mxu_bytes + (3 * e + e_pad) * f32
                  + (h * rows_q) * (h * rows_k) * f32
                  + (h * rows_k) * e * f32
                  + ((h * rows_k) * s_pad * f32 if need_weights else 0))  # constants
    total += 2 * (h * rows_q) * (h * rows_k) * f32                        # scores + probs
    total += (h * (rows_q + 2 * rows_k)) * e * f32                        # qh/kh/vh
    total += rows_q * (3 * e + e_pad) * f32                               # q/k/v/o/y
    return total


# ----------------------------- Pallas kernel ---------------------------------------
def _mha_kernel(*refs, num_heads, need_weights):
    if need_weights:
        (q_ref, k_ref, v_ref, w_ref, b_ref, mask_ref, lane_ref, sel_ref,
         o_ref, aw_ref) = refs
    else:
        q_ref, k_ref, v_ref, w_ref, b_ref, mask_ref, lane_ref, o_ref = refs
        sel_ref = aw_ref = None

    f32 = jnp.float32
    mxu = w_ref.dtype                       # matmul-operand dtype (bf16 or f32)
    rows_q, e = q_ref.shape
    rows_k = k_ref.shape[0]
    h = num_heads
    dh = e // h
    scaling = float(dh) ** -0.5
    e_out = w_ref.shape[1] - 3 * e          # lane-padded output width (multiple of 128)

    w = w_ref[...]                          # (E, 3E+Epad)  [Wq^T | Wk^T | Wv^T | Wout^T pad]
    b = b_ref[...]                          # (1, 3E+Epad)  f32 biases (pad lanes are 0)

    # ---- fused input projections (MXU bf16 operands, f32 accumulate) ----------------
    q = jnp.dot(q_ref[...], w[:, 0:e], preferred_element_type=f32) + b[:, 0:e]
    k = jnp.dot(k_ref[...], w[:, e:2 * e], preferred_element_type=f32) + b[:, e:2 * e]
    v = jnp.dot(v_ref[...], w[:, 2 * e:3 * e], preferred_element_type=f32) + b[:, 2 * e:3 * e]
    q = q * scaling

    # ---- heads without lane relayout -------------------------------------------------
    # Tile the rows h times on the SUBLANE axis and zero the non-head lanes of K/V with
    # a host-built lane mask; block (i, i) of the score matrix then contracts exactly
    # head i's dh channels (no dh=8-lane slicing / concatenation).
    lane_mask = lane_ref[...]                                    # (h*rows_k, E) f32 0/1
    qh = jnp.concatenate([q] * h, axis=0).astype(mxu)            # (h*rows_q, E)
    kh = (jnp.concatenate([k] * h, axis=0) * lane_mask).astype(mxu)
    vh = (jnp.concatenate([v] * h, axis=0) * lane_mask).astype(mxu)

    # One score matmul for every (head, batch); contract the last dims directly so no
    # transposed K is materialized (NT MXU feed).
    s = jax.lax.dot_general(qh, kh, (((1,), (1,)), ((), ())),
                            preferred_element_type=f32)          # (h*rows_q, h*rows_k)
    s = s + mask_ref[...]                   # additive block-diagonal mask (0 / -1e30)

    # ---- one softmax pass (all f32 on VPU/EUP) ---------------------------------------
    m = jnp.max(s, axis=-1, keepdims=True)
    p = jnp.exp(s - m)                      # masked entries underflow to exactly 0.0
    denom = jnp.sum(p, axis=-1, keepdims=True)
    r = pl.reciprocal(denom, approx=True)   # EUP slot instead of a VALU divide
    r = r * (2.0 - denom * r)               # one Newton step -> ~f32 accuracy
    p = p * r

    # ---- one PV matmul; head i rows only carry head i's lanes, so sublane-block adds
    # reassemble the concat(head_1..head_h) channel layout with zero lane movement. ---
    o_h = jnp.dot(p.astype(mxu), vh, preferred_element_type=f32)  # (h*rows_q, E)
    o = o_h[0:rows_q, :]
    for i in range(1, h):
        o = o + o_h[i * rows_q:(i + 1) * rows_q, :]               # (rows_q, E)

    # ---- output projection straight into the lane-padded slab (zero weight/bias
    # columns generate the padding lanes) -> unmasked 128-lane store -------------------
    y = jnp.dot(o.astype(mxu), w[:, 3 * e:3 * e + e_out],
                preferred_element_type=f32) + b[:, 3 * e:3 * e + e_out]
    o_ref[...] = y.astype(o_ref.dtype)

    if need_weights:
        # Fold (head, batch) columns back to seq positions with a zero-padded selection
        # matrix (lane-dense result), then average heads with sublane-block adds.
        aw_h = jnp.dot(p, sel_ref[...], preferred_element_type=f32)   # (h*rows_q, Spad)
        aw = aw_h[0:rows_q, :]
        for i in range(1, h):
            aw = aw + aw_h[i * rows_q:(i + 1) * rows_q, :]
        aw_ref[...] = (aw * (1.0 / h)).astype(aw_ref.dtype)


# ----------------------------- wrapper ----------------------------------------------
def multihead_attention(query, key, value, params, num_heads, *,
                        need_weights=True, mxu_dtype=jnp.bfloat16):
    """query: (L, N, E), key/value: (S, N, E)  ->  attn_output (L, N, E) and, when
    need_weights, head-averaged attn_output_weights (N, L, S); matches
    multi_head_attention_forward with no masks, dropout=0 (inference)."""
    seq_q, batch, e = query.shape
    seq_k = key.shape[0]
    assert key.shape == value.shape
    assert key.shape[1] == batch and key.shape[2] == e
    assert e % num_heads == 0
    h = num_heads
    dh = e // h
    e_pad = _round_up(e, 128)
    s_pad = _round_up(seq_k, 128)

    num_tc = _num_tensorcores_per_chip()
    bblk = _pick_batch_block(batch, h, seq_q, seq_k, num_tc)
    # Multi-step grids block the row axis at (bblk*seq) granularity; fall back to a
    # single full-batch step if that would violate the 8-sublane divisibility rule.
    if bblk < batch and ((bblk * seq_q) % 8 or (bblk * seq_k) % 8):
        bblk = batch
    batch_major = bblk < batch              # > 1 grid step -> batch-major row order
    grid = (batch // bblk,)
    rows_q, rows_k = bblk * seq_q, bblk * seq_k

    # ---- activations: 2-D (rows, E) slabs, host-cast to bf16, NO lane padding --------
    if batch_major:                          # rows ordered (batch, token)
        q2 = jnp.transpose(query, (1, 0, 2)).reshape(batch * seq_q, e).astype(mxu_dtype)
        k2 = jnp.transpose(key, (1, 0, 2)).reshape(batch * seq_k, e).astype(mxu_dtype)
        v2 = jnp.transpose(value, (1, 0, 2)).reshape(batch * seq_k, e).astype(mxu_dtype)
    else:                                    # rows ordered (token, batch): free reshape
        q2 = query.reshape(batch * seq_q, e).astype(mxu_dtype)
        k2 = key.reshape(batch * seq_k, e).astype(mxu_dtype)
        v2 = value.reshape(batch * seq_k, e).astype(mxu_dtype)

    # ---- one weight slab [Wq^T | Wk^T | Wv^T | Wout^T zero-padded to Epad] -----------
    w_in = params["in_proj_weight"]          # (3E, E) torch layout; F.linear = x @ W.T + b
    b_in = params["in_proj_bias"]            # (3E,)
    w_out = params["out_proj_weight"]        # (E, E)
    b_out = params["out_proj_bias"]          # (E,)
    w_pack = jnp.concatenate(
        [w_in[0:e].T, w_in[e:2 * e].T, w_in[2 * e:3 * e].T,
         jnp.pad(w_out.T, ((0, 0), (0, e_pad - e)))], axis=1).astype(mxu_dtype)
    b_pack = jnp.concatenate(
        [b_in, b_out, jnp.zeros((e_pad - e,), jnp.float32)])[None, :].astype(jnp.float32)

    # ---- grid-invariant host constants (DMA'd once, never rebuilt per step) ----------
    r = np.arange(h * rows_q)
    c = np.arange(h * rows_k)
    r_head, r_in = r // rows_q, r % rows_q
    c_head, c_in = c // rows_k, c % rows_k
    if batch_major:                          # rows (b, l) / cols (b, s)
        r_b, c_b, c_s = r_in // seq_q, c_in // seq_k, c_in % seq_k
    else:                                    # rows (l, n) / cols (s, n)
        r_b, c_b, c_s = r_in % bblk, c_in % bblk, c_in // bblk
    valid = (r_head[:, None] == c_head[None, :]) & (r_b[:, None] == c_b[None, :])
    mask_bias = jnp.asarray(np.where(valid, 0.0, -1e30).astype(np.float32))
    lane_mask = jnp.asarray(
        ((np.arange(e)[None, :] // dh) == c_head[:, None]).astype(np.float32))

    args = [q2, k2, v2, w_pack, b_pack, mask_bias, lane_mask]
    in_specs = [
        pl.BlockSpec((rows_q, e), lambda g: (g, 0)),
        pl.BlockSpec((rows_k, e), lambda g: (g, 0)),
        pl.BlockSpec((rows_k, e), lambda g: (g, 0)),
        pl.BlockSpec(w_pack.shape, lambda g: (0, 0)),
        pl.BlockSpec(b_pack.shape, lambda g: (0, 0)),
        pl.BlockSpec(mask_bias.shape, lambda g: (0, 0)),
        pl.BlockSpec(lane_mask.shape, lambda g: (0, 0)),
    ]
    out_shape = [jax.ShapeDtypeStruct((batch * seq_q, e_pad), jnp.float32)]
    out_specs = [pl.BlockSpec((rows_q, e_pad), lambda g: (g, 0))]
    if need_weights:
        sel = np.zeros((h * rows_k, s_pad), np.float32)
        sel[c, c_s] = 1.0                    # column -> its seq position (pad lanes stay 0)
        args.append(jnp.asarray(sel))
        in_specs.append(pl.BlockSpec(sel.shape, lambda g: (0, 0)))
        out_shape.append(jax.ShapeDtypeStruct((batch * seq_q, s_pad), jnp.float32))
        out_specs.append(pl.BlockSpec((rows_q, s_pad), lambda g: (g, 0)))

    est = _estimate_vmem_bytes(rows_q, rows_k, e, e_pad, s_pad, h,
                               jnp.dtype(mxu_dtype).itemsize, need_weights)
    vmem_limit = int(min(max(2 * est, 32 * 1024 * 1024), 48 * 1024 * 1024))

    outs = pl.pallas_call(
        functools.partial(_mha_kernel, num_heads=h, need_weights=need_weights),
        out_shape=tuple(out_shape),
        grid_spec=pltpu.PrefetchScalarGridSpec(
            num_scalar_prefetch=0,
            grid=grid,
            in_specs=in_specs,
            out_specs=tuple(out_specs),
        ),
        compiler_params=pltpu.CompilerParams(
            dimension_semantics=("parallel",),
            vmem_limit_bytes=vmem_limit),
    )(*args)

    out = outs[0]
    if batch_major:
        attn_output = jnp.transpose(out.reshape(batch, seq_q, e_pad)[:, :, :e], (1, 0, 2))
    else:
        attn_output = out.reshape(seq_q, batch, e_pad)[:, :, :e]
    if not need_weights:
        return attn_output, None
    aw = outs[1]
    if batch_major:
        attn_weights = aw.reshape(batch, seq_q, s_pad)[:, :, :seq_k]
    else:
        attn_weights = jnp.transpose(
            aw.reshape(seq_q, batch, s_pad)[:, :, :seq_k], (1, 0, 2))
    return attn_output, attn_weights


# ----------------------------- params + pure-JAX reference ---------------------------
def init_mha_params(key, embed_dim, num_heads):
    del num_heads
    k1, k2, k3, k4 = jax.random.split(key, 4)

    def xavier_uniform(k, shape):            # torch (out, in) layout
        fan_out, fan_in = shape
        bound = (6.0 / (fan_in + fan_out)) ** 0.5
        return jax.random.uniform(k, shape, jnp.float32, -bound, bound)

    # torch zero-inits the biases; small random values here so the bias path of the
    # kernel is actually exercised by the check.
    return dict(
        in_proj_weight=xavier_uniform(k1, (3 * embed_dim, embed_dim)),
        in_proj_bias=jax.random.uniform(k2, (3 * embed_dim,), jnp.float32, -0.1, 0.1),
        out_proj_weight=xavier_uniform(k3, (embed_dim, embed_dim)),
        out_proj_bias=jax.random.uniform(k4, (embed_dim,), jnp.float32, -0.1, 0.1),
    )


def reference_mha(query, key, value, params, num_heads):
    """Independent pure-JAX transcription of multi_head_attention_forward (f32,
    HIGHEST matmul precision so the reference itself is trustworthy on TPU)."""
    hi = jax.lax.Precision.HIGHEST
    seq_q, batch, e = query.shape
    seq_k = key.shape[0]
    h = num_heads
    dh = e // h
    w_in, b_in = params["in_proj_weight"], params["in_proj_bias"]
    w_out, b_out = params["out_proj_weight"], params["out_proj_bias"]

    q = jnp.dot(query, w_in[0:e].T, precision=hi) + b_in[0:e]
    k = jnp.dot(key, w_in[e:2 * e].T, precision=hi) + b_in[e:2 * e]
    v = jnp.dot(value, w_in[2 * e:3 * e].T, precision=hi) + b_in[2 * e:3 * e]
    q = q * (float(dh) ** -0.5)

    q = jnp.transpose(q.reshape(seq_q, batch * h, dh), (1, 0, 2))
    k = jnp.transpose(k.reshape(seq_k, batch * h, dh), (1, 0, 2))
    v = jnp.transpose(v.reshape(seq_k, batch * h, dh), (1, 0, 2))

    logits = jnp.einsum("gld,gsd->gls", q, k, precision=hi)
    p = jax.nn.softmax(logits, axis=-1)
    o = jnp.einsum("gls,gsd->gld", p, v, precision=hi)
    o = jnp.transpose(o, (1, 0, 2)).reshape(seq_q, batch, e)
    attn_output = jnp.dot(o, w_out.T, precision=hi) + b_out
    attn_weights = p.reshape(batch, h, seq_q, seq_k).sum(axis=1) / h
    return attn_output, attn_weights


if __name__ == "__main__":
    EMBED_DIM, NUM_HEADS = 32, 4
    SEQ_Q, SEQ_K, BATCH = 8, 16, 4

    root = jax.random.PRNGKey(0)
    kq, kk, kv, kp = jax.random.split(root, 4)
    query = jax.random.normal(kq, (SEQ_Q, BATCH, EMBED_DIM), jnp.float32)   # (L, N, E)
    key = jax.random.normal(kk, (SEQ_K, BATCH, EMBED_DIM), jnp.float32)     # (S, N, E)
    value = jax.random.normal(kv, (SEQ_K, BATCH, EMBED_DIM), jnp.float32)   # (S, N, E)
    params = init_mha_params(kp, EMBED_DIM, NUM_HEADS)

    ref_out, ref_w = reference_mha(query, key, value, params, NUM_HEADS)

    # f32 parity mode (tight tolerance).
    out32, w32 = multihead_attention(query, key, value, params, NUM_HEADS,
                                     need_weights=True, mxu_dtype=jnp.float32)
    out32 = jax.block_until_ready(out32)
    w32 = jax.block_until_ready(w32)
    np.testing.assert_allclose(np.asarray(out32), np.asarray(ref_out), rtol=2e-3, atol=2e-3)
    np.testing.assert_allclose(np.asarray(w32), np.asarray(ref_w), rtol=2e-3, atol=2e-3)

    # bf16 MXU-operand mode (default; looser tolerance for bf16 operand rounding).
    out16, w16 = multihead_attention(query, key, value, params, NUM_HEADS,
                                     need_weights=True, mxu_dtype=jnp.bfloat16)
    out16 = jax.block_until_ready(out16)
    w16 = jax.block_until_ready(w16)
    np.testing.assert_allclose(np.asarray(out16), np.asarray(ref_out), rtol=3e-2, atol=3e-2)
    np.testing.assert_allclose(np.asarray(w16), np.asarray(ref_w), rtol=3e-2, atol=3e-2)

    # need_weights=False fast path (no attention-weights output stream).
    out_nw, w_none = multihead_attention(query, key, value, params, NUM_HEADS,
                                         need_weights=False)
    out_nw = jax.block_until_ready(out_nw)
    assert w_none is None
    np.testing.assert_allclose(np.asarray(out_nw), np.asarray(ref_out), rtol=3e-2, atol=3e-2)

    assert out16.shape == (SEQ_Q, BATCH, EMBED_DIM)
    assert w16.shape == (BATCH, SEQ_Q, SEQ_K)
    print("KERNEL_OK")
</pallas_src>

<mosaic_0001>
module attributes {stable_mosaic.version = 11 : i64} {
  func.func @_mha_kernel(%arg0: i32, %arg1: memref<32x32xf32, #tpu.memory_space<vmem>>, %arg2: memref<64x32xf32, #tpu.memory_space<vmem>>, %arg3: memref<64x32xf32, #tpu.memory_space<vmem>>, %arg4: memref<32x224xf32, #tpu.memory_space<vmem>>, %arg5: memref<1x224xf32, #tpu.memory_space<vmem>>, %arg6: memref<128x256xf32, #tpu.memory_space<vmem>>, %arg7: memref<256x32xf32, #tpu.memory_space<vmem>>, %arg8: memref<256x128xf32, #tpu.memory_space<vmem>>, %arg9: memref<32x128xf32, #tpu.memory_space<vmem>>, %arg10: memref<32x128xf32, #tpu.memory_space<vmem>>) attributes {dimension_semantics = [#tpu.dimension_semantics<parallel>], iteration_bounds = array<i64: 1>, scalar_prefetch = 0 : i64, scratch_operands = 0 : i64, tpu.core_type = #tpu.core_type<tc>, window_params = [{transform_indices = @transform_0, window_bounds = array<i64: 32, 32>}, {transform_indices = @transform_1, window_bounds = array<i64: 64, 32>}, {transform_indices = @transform_2, window_bounds = array<i64: 64, 32>}, {pipeline_mode = #tpu.pipeline_mode<synchronous>, transform_indices = @transform_3, window_bounds = array<i64: 32, 224>}, {pipeline_mode = #tpu.pipeline_mode<synchronous>, transform_indices = @transform_4, window_bounds = array<i64: 1, 224>}, {pipeline_mode = #tpu.pipeline_mode<synchronous>, transform_indices = @transform_5, window_bounds = array<i64: 128, 256>}, {pipeline_mode = #tpu.pipeline_mode<synchronous>, transform_indices = @transform_6, window_bounds = array<i64: 256, 32>}, {pipeline_mode = #tpu.pipeline_mode<synchronous>, transform_indices = @transform_7, window_bounds = array<i64: 256, 128>}, {transform_indices = @transform_8, window_bounds = array<i64: 32, 128>}, {transform_indices = @transform_9, window_bounds = array<i64: 32, 128>}]} {
    %c0 = arith.constant 0 : index
    %c0_0 = arith.constant 0 : index
    %0 = vector.load %arg4[%c0, %c0_0] : memref<32x224xf32, #tpu.memory_space<vmem>>, vector<32x224xf32>
    %c0_1 = arith.constant 0 : index
    %c0_2 = arith.constant 0 : index
    %1 = vector.load %arg5[%c0_1, %c0_2] : memref<1x224xf32, #tpu.memory_space<vmem>>, vector<1x224xf32>
    %c0_3 = arith.constant 0 : index
    %c0_4 = arith.constant 0 : index
    %2 = vector.load %arg1[%c0_3, %c0_4] : memref<32x32xf32, #tpu.memory_space<vmem>>, vector<32x32xf32>
    %3 = vector.extract_strided_slice %0 {offsets = [0, 0], sizes = [32, 32], strides = [1, 1]} : vector<32x224xf32> to vector<32x32xf32>
    %cst = arith.constant dense<0.000000e+00> : vector<32x32xf32>
    %4 = tpu.matmul %2, %3, %cst {dimension_numbers = #tpu.dot_dimension_numbers<[1], [0], [0], [1], [0, 0, 1, 1], [], []>} : vector<32x32xf32>, vector<32x32xf32>, vector<32x32xf32> -> vector<32x32xf32>
    %5 = vector.extract_strided_slice %1 {offsets = [0, 0], sizes = [1, 32], strides = [1, 1]} : vector<1x224xf32> to vector<1x32xf32>
    %6 = vector.broadcast %5 : vector<1x32xf32> to vector<32x32xf32>
    %7 = arith.addf %4, %6 : vector<32x32xf32>
    %c0_5 = arith.constant 0 : index
    %c0_6 = arith.constant 0 : index
    %8 = vector.load %arg2[%c0_5, %c0_6] : memref<64x32xf32, #tpu.memory_space<vmem>>, vector<64x32xf32>
    %9 = vector.extract_strided_slice %0 {offsets = [0, 32], sizes = [32, 32], strides = [1, 1]} : vector<32x224xf32> to vector<32x32xf32>
    %cst_7 = arith.constant dense<0.000000e+00> : vector<64x32xf32>
    %10 = tpu.matmul %8, %9, %cst_7 {dimension_numbers = #tpu.dot_dimension_numbers<[1], [0], [0], [1], [0, 0, 1, 1], [], []>} : vector<64x32xf32>, vector<32x32xf32>, vector<64x32xf32> -> vector<64x32xf32>
    %11 = vector.extract_strided_slice %1 {offsets = [0, 32], sizes = [1, 32], strides = [1, 1]} : vector<1x224xf32> to vector<1x32xf32>
    %12 = vector.broadcast %11 : vector<1x32xf32> to vector<64x32xf32>
    %13 = arith.addf %10, %12 : vector<64x32xf32>
    %c0_8 = arith.constant 0 : index
    %c0_9 = arith.constant 0 : index
    %14 = vector.load %arg3[%c0_8, %c0_9] : memref<64x32xf32, #tpu.memory_space<vmem>>, vector<64x32xf32>
    %15 = vector.extract_strided_slice %0 {offsets = [0, 64], sizes = [32, 32], strides = [1, 1]} : vector<32x224xf32> to vector<32x32xf32>
    %cst_10 = arith.constant dense<0.000000e+00> : vector<64x32xf32>
    %16 = tpu.matmul %14, %15, %cst_10 {dimension_numbers = #tpu.dot_dimension_numbers<[1], [0], [0], [1], [0, 0, 1, 1], [], []>} : vector<64x32xf32>, vector<32x32xf32>, vector<64x32xf32> -> vector<64x32xf32>
    %17 = vector.extract_strided_slice %1 {offsets = [0, 64], sizes = [1, 32], strides = [1, 1]} : vector<1x224xf32> to vector<1x32xf32>
    %18 = vector.broadcast %17 : vector<1x32xf32> to vector<64x32xf32>
    %19 = arith.addf %16, %18 : vector<64x32xf32>
    %cst_11 = arith.constant 0.353553385 : f32
    %20 = vector.broadcast %cst_11 : f32 to vector<32x32xf32>
    %21 = arith.mulf %7, %20 : vector<32x32xf32>
    %c0_12 = arith.constant 0 : index
    %c0_13 = arith.constant 0 : index
    %22 = vector.load %arg7[%c0_12, %c0_13] : memref<256x32xf32, #tpu.memory_space<vmem>>, vector<256x32xf32>
    %23 = tpu.concatenate %21, %21, %21, %21 in 0 : vector<32x32xf32>, vector<32x32xf32>, vector<32x32xf32>, vector<32x32xf32> -> vector<128x32xf32>
    %24 = tpu.concatenate %13, %13, %13, %13 in 0 : vector<64x32xf32>, vector<64x32xf32>, vector<64x32xf32>, vector<64x32xf32> -> vector<256x32xf32>
    %25 = arith.mulf %24, %22 : vector<256x32xf32>
    %26 = tpu.concatenate %19, %19, %19, %19 in 0 : vector<64x32xf32>, vector<64x32xf32>, vector<64x32xf32>, vector<64x32xf32> -> vector<256x32xf32>
    %27 = arith.mulf %26, %22 : vector<256x32xf32>
    %cst_14 = arith.constant dense<0.000000e+00> : vector<128x256xf32>
    %28 = tpu.matmul %23, %25, %cst_14 {dimension_numbers = #tpu.dot_dimension_numbers<[1], [1], [0], [0], [0, 0, 1, 0], [], []>} : vector<128x32xf32>, vector<256x32xf32>, vector<128x256xf32> -> vector<128x256xf32>
    %c0_15 = arith.constant 0 : index
    %c0_16 = arith.constant 0 : index
    %29 = vector.load %arg6[%c0_15, %c0_16] : memref<128x256xf32, #tpu.memory_space<vmem>>, vector<128x256xf32>
    %30 = arith.addf %28, %29 : vector<128x256xf32>
    %cst_17 = arith.constant dense<0xFF800000> : vector<128xf32>
    %31 = vector.multi_reduction <maximumf>, %30, %cst_17 [1] : vector<128x256xf32> to vector<128xf32>
    %32 = vector.shape_cast %31 : vector<128xf32> to vector<128x1xf32>
    %33 = vector.broadcast %32 : vector<128x1xf32> to vector<128x256xf32>
    %34 = arith.subf %30, %33 : vector<128x256xf32>
    %35 = math.exp %34 : vector<128x256xf32>
    %cst_18 = arith.constant dense<0.000000e+00> : vector<128xf32>
    %36 = vector.multi_reduction <add>, %35, %cst_18 [1] : vector<128x256xf32> to vector<128xf32>
    %37 = vector.shape_cast %36 : vector<128xf32> to vector<128x1xf32>
    %38 = tpu.reciprocal %37 {approx = true} : vector<128x1xf32> -> vector<128x1xf32>
    %39 = arith.mulf %37, %38 : vector<128x1xf32>
    %cst_19 = arith.constant 2.000000e+00 : f32
    %40 = vector.broadcast %cst_19 : f32 to vector<128x1xf32>
    %41 = arith.subf %40, %39 : vector<128x1xf32>
    %42 = arith.mulf %38, %41 : vector<128x1xf32>
    %43 = vector.broadcast %42 : vector<128x1xf32> to vector<128x256xf32>
    %44 = arith.mulf %35, %43 : vector<128x256xf32>
    %cst_20 = arith.constant dense<0.000000e+00> : vector<128x32xf32>
    %45 = tpu.matmul %44, %27, %cst_20 {dimension_numbers = #tpu.dot_dimension_numbers<[1], [0], [0], [1], [0, 0, 1, 1], [], []>} : vector<128x256xf32>, vector<256x32xf32>, vector<128x32xf32> -> vector<128x32xf32>
    %46 = vector.extract_strided_slice %45 {offsets = [0, 0], sizes = [32, 32], strides = [1, 1]} : vector<128x32xf32> to vector<32x32xf32>
    %47 = vector.extract_strided_slice %45 {offsets = [32, 0], sizes = [32, 32], strides = [1, 1]} : vector<128x32xf32> to vector<32x32xf32>
    %48 = arith.addf %46, %47 : vector<32x32xf32>
    %49 = vector.extract_strided_slice %45 {offsets = [64, 0], sizes = [32, 32], strides = [1, 1]} : vector<128x32xf32> to vector<32x32xf32>
    %50 = arith.addf %48, %49 : vector<32x32xf32>
    %51 = vector.extract_strided_slice %45 {offsets = [96, 0], sizes = [32, 32], strides = [1, 1]} : vector<128x32xf32> to vector<32x32xf32>
    %52 = arith.addf %50, %51 : vector<32x32xf32>
    %53 = vector.extract_strided_slice %0 {offsets = [0, 96], sizes = [32, 128], strides = [1, 1]} : vector<32x224xf32> to vector<32x128xf32>
    %cst_21 = arith.constant dense<0.000000e+00> : vector<32x128xf32>
    %54 = tpu.matmul %52, %53, %cst_21 {dimension_numbers = #tpu.dot_dimension_numbers<[1], [0], [0], [1], [0, 0, 1, 1], [], []>} : vector<32x32xf32>, vector<32x128xf32>, vector<32x128xf32> -> vector<32x128xf32>
    %55 = vector.extract_strided_slice %1 {offsets = [0, 96], sizes = [1, 128], strides = [1, 1]} : vector<1x224xf32> to vector<1x128xf32>
    %56 = vector.broadcast %55 : vector<1x128xf32> to vector<32x128xf32>
    %57 = arith.addf %54, %56 : vector<32x128xf32>
    %c0_22 = arith.constant 0 : index
    %c0_23 = arith.constant 0 : index
    %58 = vector.load %arg9[%c0_22, %c0_23] : memref<32x128xf32, #tpu.memory_space<vmem>>, vector<32x128xf32>
    tpu.vector_store %arg9[%c0_22, %c0_23], %57 {strides = array<i32>} : memref<32x128xf32, #tpu.memory_space<vmem>>, vector<32x128xf32>,
    %c0_24 = arith.constant 0 : index
    %c0_25 = arith.constant 0 : index
    %59 = vector.load %arg8[%c0_24, %c0_25] : memref<256x128xf32, #tpu.memory_space<vmem>>, vector<256x128xf32>
    %cst_26 = arith.constant dense<0.000000e+00> : vector<128x128xf32>
    %60 = tpu.matmul %44, %59, %cst_26 {dimension_numbers = #tpu.dot_dimension_numbers<[1], [0], [0], [1], [0, 0, 1, 1], [], []>} : vector<128x256xf32>, vector<256x128xf32>, vector<128x128xf32> -> vector<128x128xf32>
    %61 = vector.extract_strided_slice %60 {offsets = [0, 0], sizes = [32, 128], strides = [1, 1]} : vector<128x128xf32> to vector<32x128xf32>
    %62 = vector.extract_strided_slice %60 {offsets = [32, 0], sizes = [32, 128], strides = [1, 1]} : vector<128x128xf32> to vector<32x128xf32>
    %63 = arith.addf %61, %62 : vector<32x128xf32>
    %64 = vector.extract_strided_slice %60 {offsets = [64, 0], sizes = [32, 128], strides = [1, 1]} : vector<128x128xf32> to vector<32x128xf32>
    %65 = arith.addf %63, %64 : vector<32x128xf32>
    %66 = vector.extract_strided_slice %60 {offsets = [96, 0], sizes = [32, 128], strides = [1, 1]} : vector<128x128xf32> to vector<32x128xf32>
    %67 = arith.addf %65, %66 : vector<32x128xf32>
    %cst_27 = arith.constant 2.500000e-01 : f32
    %68 = vector.broadcast %cst_27 : f32 to vector<32x128xf32>
    %69 = arith.mulf %67, %68 : vector<32x128xf32>
    %c0_28 = arith.constant 0 : index
    %c0_29 = arith.constant 0 : index
    %70 = vector.load %arg10[%c0_28, %c0_29] : memref<32x128xf32, #tpu.memory_space<vmem>>, vector<32x128xf32>
    tpu.vector_store %arg10[%c0_28, %c0_29], %69 {strides = array<i32>} : memref<32x128xf32, #tpu.memory_space<vmem>>, vector<32x128xf32>,
    return
  }
  func.func @transform_0(%arg0: i32) -> (i32, i32) {
    %c0_i32 = arith.constant 0 : i32
    %c0_i32_0 = arith.constant 0 : i32
    return %arg0, %c0_i32 : i32, i32
  }
  func.func @transform_1(%arg0: i32) -> (i32, i32) {
    %c0_i32 = arith.constant 0 : i32
    %c0_i32_0 = arith.constant 0 : i32
    return %arg0, %c0_i32 : i32, i32
  }
  func.func @transform_2(%arg0: i32) -> (i32, i32) {
    %c0_i32 = arith.constant 0 : i32
    %c0_i32_0 = arith.constant 0 : i32
    return %arg0, %c0_i32 : i32, i32
  }
  func.func @transform_3(%arg0: i32) -> (i32, i32) {
    %c0_i32 = arith.constant 0 : i32
    %c0_i32_0 = arith.constant 0 : i32
    %c0_i32_1 = arith.constant 0 : i32
    return %c0_i32, %c0_i32_0 : i32, i32
  }
  func.func @transform_4(%arg0: i32) -> (i32, i32) {
    %c0_i32 = arith.constant 0 : i32
    %c0_i32_0 = arith.constant 0 : i32
    %c0_i32_1 = arith.constant 0 : i32
    return %c0_i32, %c0_i32_0 : i32, i32
  }
  func.func @transform_5(%arg0: i32) -> (i32, i32) {
    %c0_i32 = arith.constant 0 : i32
    %c0_i32_0 = arith.constant 0 : i32
    %c0_i32_1 = arith.constant 0 : i32
    return %c0_i32, %c0_i32_0 : i32, i32
  }
  func.func @transform_6(%arg0: i32) -> (i32, i32) {
    %c0_i32 = arith.constant 0 : i32
    %c0_i32_0 = arith.constant 0 : i32
    %c0_i32_1 = arith.constant 0 : i32
    return %c0_i32, %c0_i32_0 : i32, i32
  }
  func.func @transform_7(%arg0: i32) -> (i32, i32) {
    %c0_i32 = arith.constant 0 : i32
    %c0_i32_0 = arith.constant 0 : i32
    %c0_i32_1 = arith.constant 0 : i32
    return %c0_i32, %c0_i32_0 : i32, i32
  }
  func.func @transform_8(%arg0: i32) -> (i32, i32) {
    %c0_i32 = arith.constant 0 : i32
    %c0_i32_0 = arith.constant 0 : i32
    return %arg0, %c0_i32 : i32, i32
  }
  func.func @transform_9(%arg0: i32) -> (i32, i32) {
    %c0_i32 = arith.constant 0 : i32
    %c0_i32_0 = arith.constant 0 : i32
    return %arg0, %c0_i32 : i32, i32
  }
}

</mosaic_0001>

<llo_original>
// kernel: tpu_custom_call.1
$region0: #{tpu_custom_call.1}
  #allocation0 [shape = 'u32[]', space=smem, size = 0x4, offset = 0x4, fixed_abs, tag = 'smem constant byte address 0x4 - core index']
  #allocation1 [shape = 'u32[144,128]{1,0:T(1,128)}', space=vmem, size = 0x12000, scoped, tag = 'internal scratch']
  %s0 = inlined_call_operand.hbm [shape: f32[32,32], index: 0, kind: input, shape index: {}]
  %s1 = inlined_call_operand.vmem [shape: f32[64,32], index: 1, kind: input, shape index: {}]
  %s2 = inlined_call_operand.vmem [shape: f32[64,32], index: 2, kind: input, shape index: {}]
  %s3 = inlined_call_operand.hbm [shape: f32[32,224], index: 3, kind: input, shape index: {}]
  %s4 = inlined_call_operand.vmem [shape: f32[1,224], index: 4, kind: input, shape index: {}]
  %s5 = inlined_call_operand.vmem [shape: f32[128,256], index: 5, kind: input, shape index: {}]
  %s6 = inlined_call_operand.vmem [shape: f32[256,32], index: 6, kind: input, shape index: {}]
  %s7 = inlined_call_operand.vmem [shape: f32[256,128], index: 7, kind: input, shape index: {}]
  %s8 = inlined_call_operand.hbm [shape: f32[32,128], index: 8, kind: output, shape index: {0}]
  %s9 = inlined_call_operand.hbm [shape: f32[32,128], index: 9, kind: output, shape index: {1}]
  %10 = xla_tuple %s8, %s9
  %s11 = sld [smem:[#allocation0]]
  $region58: #{tpu_custom_call.1} parent=0
    _
  %s13 = ssub.s32 1, %s11
  %s14 = scalar_select 0, %s13, %s11
  $region1: #{tpu_custom_call.1} parent=0
    #allocation2 [shape = 'u8[16384]{0}', space=vmem, size = 0x4000, scoped, tag = 'input window, operand 0, single buffered']
    #allocation3 [shape = 's32[1]{0}', space=sflag, size = 0x4, scoped, tag = 'scoped memory for tpu_custom_call.1']
    #allocation4 [shape = 's32[1]{0}', space=sflag, size = 0x4, scoped, tag = 'scoped memory for tpu_custom_call.1']
    #allocation5 [shape = 'u8[32768]{0}', space=vmem, size = 0x8000, scoped, tag = 'input window, operand 3, single buffered']
    #allocation6 [shape = 's32[1]{0}', space=sflag, size = 0x4, scoped, tag = 'scoped memory for tpu_custom_call.1']
    #allocation7 [shape = 'u8[16384]{0}', space=vmem, size = 0x4000, scoped, tag = 'output window, operand 0, single buffered']
    #allocation8 [shape = 'u8[16384]{0}', space=vmem, size = 0x4000, scoped, tag = 'output window, operand 1, single buffered']
    #allocation9 [shape = 's32[1]{0}', space=sflag, size = 0x4, scoped, tag = 'scoped memory for tpu_custom_call.1']
    %15 = vsyncpa [#allocation3], 0
    %16 = vsyncpa [#allocation6], 0
    %17 = vsyncpa [#allocation4], 0
    %18 = vsyncpa [#allocation9], 0
    // Predicated region
    $region2: #{tpu_custom_call.1} parent=1 // pred_check
      _
    $region3: #{tpu_custom_call.1} parent=1 // pred_check_branch
      %20 = sbr.rel (0) target = $region5
    $region4: #{tpu_custom_call.1} parent=1 // pred_region
      %s22 = ssub.s32 512, 512
      %23 = vsyncadd [#allocation3], %s22
      %s24 = sshll.u32 [#allocation2], 4
      %s25 = int_to_ptr.vmem [resolvable:$true] %s24
      %30 = dma.hbm_to_vmem [thread:$0]  %s0, 512, %s25, [#allocation3], 128, 128, 8
    $region5: #{tpu_custom_call.1} parent=1 // pred_fallthru
      _
    // Predicated region
    $region6: #{tpu_custom_call.1} parent=1 // pred_check
      _
    $region7: #{tpu_custom_call.1} parent=1 // pred_check_branch
      %32 = sbr.rel (0) target = $region9
    $region8: #{tpu_custom_call.1} parent=1 // pred_region
      _
    $region9: #{tpu_custom_call.1} parent=1 // pred_fallthru
      _
    // Predicated region
    $region10: #{tpu_custom_call.1} parent=1 // pred_check
      _
    $region11: #{tpu_custom_call.1} parent=1 // pred_check_branch
      %34 = sbr.rel (0) target = $region13
    $region12: #{tpu_custom_call.1} parent=1 // pred_region
      _
    $region13: #{tpu_custom_call.1} parent=1 // pred_fallthru
      _
    // Predicated region
    $region14: #{tpu_custom_call.1} parent=1 // pred_check
      _
    $region15: #{tpu_custom_call.1} parent=1 // pred_check_branch
      %36 = sbr.rel (0) target = $region17
    $region16: #{tpu_custom_call.1} parent=1 // pred_region
      %s38 = ssub.s32 1024, 1024
      %39 = vsyncadd [#allocation6], %s38
      %s40 = sshll.u32 [#allocation5], 4
      %s41 = int_to_ptr.vmem [resolvable:$true] %s40
      %46 = dma.hbm_to_vmem [thread:$0]  %s3, 1024, %s41, [#allocation6], 256, 256, 16
    $region17: #{tpu_custom_call.1} parent=1 // pred_fallthru
      _
    // Predicated region
    $region18: #{tpu_custom_call.1} parent=1 // pred_check
      _
    $region19: #{tpu_custom_call.1} parent=1 // pred_check_branch
      %48 = sbr.rel (0) target = $region21
    $region20: #{tpu_custom_call.1} parent=1 // pred_region
      _
    $region21: #{tpu_custom_call.1} parent=1 // pred_fallthru
      _
    // Predicated region
    $region22: #{tpu_custom_call.1} parent=1 // pred_check
      _
    $region23: #{tpu_custom_call.1} parent=1 // pred_check_branch
      %50 = sbr.rel (0) target = $region25
    $region24: #{tpu_custom_call.1} parent=1 // pred_region
      _
    $region25: #{tpu_custom_call.1} parent=1 // pred_fallthru
      _
    // Predicated region
    $region26: #{tpu_custom_call.1} parent=1 // pred_check
      _
    $region27: #{tpu_custom_call.1} parent=1 // pred_check_branch
      %52 = sbr.rel (0) target = $region29
    $region28: #{tpu_custom_call.1} parent=1 // pred_region
      _
    $region29: #{tpu_custom_call.1} parent=1 // pred_fallthru
      _
    // Predicated region
    $region30: #{tpu_custom_call.1} parent=1 // pred_check
      _
    $region31: #{tpu_custom_call.1} parent=1 // pred_check_branch
      %54 = sbr.rel (0) target = $region33
    $region32: #{tpu_custom_call.1} parent=1 // pred_region
      _
    $region33: #{tpu_custom_call.1} parent=1 // pred_fallthru
      _
    // Predicated region
    $region34: #{tpu_custom_call.1} parent=1 // pred_check
      _
    $region35: #{tpu_custom_call.1} parent=1 // pred_check_branch
      %56 = sbr.rel (0) target = $region37
    $region36: #{tpu_custom_call.1} parent=1 // pred_region
      %57 = dma.done [#allocation3], 512
    $region37: #{tpu_custom_call.1} parent=1 // pred_fallthru
      _
    // Predicated region
    $region38: #{tpu_custom_call.1} parent=1 // pred_check
      _
    $region39: #{tpu_custom_call.1} parent=1 // pred_check_branch
      %59 = sbr.rel (0) target = $region41
    $region40: #{tpu_custom_call.1} parent=1 // pred_region
      %60 = dma.done [#allocation6], 1024
    $region41: #{tpu_custom_call.1} parent=1 // pred_fallthru
      _
    %v61 = vld [vmem:[#allocation5] sm:$0xff]
    %v62 = vld [vmem:[#allocation5 + $0x8] sm:$0xff]
    %v63 = vld [vmem:[#allocation5 + $0x10] sm:$0xff]
    %v64 = vld [vmem:[#allocation5 + $0x18] sm:$0xff]
    %v65 = vld [vmem:[#allocation5 + $0x20] sm:$0xff]
    %v66 = vld [vmem:[#allocation5 + $0x28] sm:$0xff]
    %v67 = vld [vmem:[#allocation5 + $0x30] sm:$0xff]
    %v68 = vld [vmem:[#allocation5 + $0x38] sm:$0xff]
    %v69 = vld [vmem:[%s4] sm:$0x3]
    %v70 = vld [vmem:[#allocation2] sm:$0xff]
    %v71 = vld [vmem:[#allocation2 + $0x8] sm:$0xff]
    %v72 = vld [vmem:[#allocation2 + $0x10] sm:$0xff]
    %v73 = vld [vmem:[#allocation2 + $0x18] sm:$0xff]
    %v75 = vlaneseq
    %v76 = vshrl.u32 %v75, 7
    %v77 = vsub.s32 0, %v76
    %v78 = vrot.slane %v69, %v77
    %vm80 = vcmask 261120
    %v82 = vsel %vm80, %v70, 0
    %v85 = vsel %vm80, %v71, 0
    %v88 = vsel %vm80, %v72, 0
    %v91 = vsel %vm80, %v73, 0
    %93 = vmatprep.subr.mxu0 0.0
    %94 = vmatpush1.msra.mxu0 %v61
    %95 = vmatprep.subr.mxu0 0.0
    %96 = vmatpush1.msra.mxu0 %v63
    %97 = vmatprep.subr.mxu0 0.0
    %98 = vmatpush1.msra.mxu0 %v65
    %99 = vmatprep.subr.mxu0 0.0
    %100 = vmatpush1.msra.mxu0 %v67
    %101 = vmatprep.subr.mxu0 0.0
    %102 = vmatpush1.msra.mxu0 0.0
    %103 = vmatprep.subr.mxu0 0.0
    %104 = vmatpush1.msra.mxu0 0.0
    %105 = vmatprep.subr.mxu0 0.0
    %106 = vmatpush1.msra.mxu0 0.0
    %107 = vmatprep.subr.mxu0 0.0
    %108 = vmatpush1.msra.mxu0 0.0
    %109 = vmatprep.subr.mxu0 0.0
    %110 = vmatpush1.msra.mxu0 0.0
    %111 = vmatprep.subr.mxu0 0.0
    %112 = vmatpush1.msra.mxu0 0.0
    %113 = vmatprep.subr.mxu0 0.0
    %114 = vmatpush1.msra.mxu0 0.0
    %115 = vmatprep.subr.mxu0 0.0
    %116 = vmatpush1.msra.mxu0 0.0
    %117 = vmatprep.subr.mxu0 0.0
    %118 = vmatpush1.msra.mxu0 0.0
    %119 = vmatprep.subr.mxu0 0.0
    %120 = vmatpush1.msra.mxu0 0.0
    %121 = vmatprep.subr.mxu0 0.0
    %122 = vmatpush1.msra.mxu0 0.0
    %123 = vmatprep.subr.mxu0 0.0
    %124 = vmatpush1.msra.mxu0 0.0
    %125 = vmatprep.subr.mxu0 0.0
    %126 = vmatpush1.msra.mxu0 0.0
    %127 = vmatprep.subr.mxu0 0.0
    %128 = vmatpush1.msra.mxu0 0.0
    %129 = vmatprep.subr.mxu0 0.0
    %130 = vmatpush1.msra.mxu0 0.0
    %131 = vmatprep.subr.mxu0 0.0
    %132 = vmatpush1.msra.mxu0 0.0
    %133 = vmatprep.subr.mxu0 0.0
    %134 = vmatpush1.msra.mxu0 0.0
    %135 = vmatprep.subr.mxu0 0.0
    %136 = vmatpush1.msra.mxu0 0.0
    %137 = vmatprep.subr.mxu0 0.0
    %138 = vmatpush1.msra.mxu0 0.0
    %139 = vmatprep.subr.mxu0 0.0
    %140 = vmatpush1.msra.mxu0 0.0
    %141 = vmatprep.subr.mxu0 0.0
    %142 = vmatpush1.msra.mxu0 0.0
    %143 = vmatprep.subr.mxu0 0.0
    %144 = vmatpush1.msra.mxu0 0.0
    %145 = vmatprep.subr.mxu0 0.0
    %146 = vmatpush1.msra.mxu0 0.0
    %147 = vmatprep.subr.mxu0 0.0
    %148 = vmatpush1.msra.mxu0 0.0
    %149 = vmatprep.subr.mxu0 0.0
    %150 = vmatpush1.msra.mxu0 0.0
    %151 = vmatprep.subr.mxu0 0.0
    %152 = vmatpush1.msra.mxu0 0.0
    %153 = vmatprep.subr.mxu0 0.0
    %154 = vmatpush1.msra.mxu0 0.0
    %155 = vmatprep.subr.mxu0 0.0
    %156 = vmatpush1.msra.mxu0 0.0
    %157 = vmatprep.mubr.f32.mxu0 0.0
    %158 = vmatmul.mubr.f32.gmra.mrb[0].mxu0 %v82
    %v159 = vpop.f32.mrb[0].mxu0
    %v160 = vadd.f32 %v78, %v159
    %v161 = vpop.f32.mrb[0].mxu0
    %162 = vmatprep.mubr.f32.mxu0 0.0
    %163 = vmatmul.mubr.f32.gmra.mrb[0].mxu0 %v85
    %v164 = vpop.f32.mrb[0].mxu0
    %v165 = vadd.f32 %v78, %v164
    %v166 = vpop.f32.mrb[0].mxu0
    %167 = vmatprep.mubr.f32.mxu0 0.0
    %168 = vmatmul.mubr.f32.gmra.mrb[0].mxu0 %v88
    %v169 = vpop.f32.mrb[0].mxu0
    %v170 = vadd.f32 %v78, %v169
    %v171 = vpop.f32.mrb[0].mxu0
    %172 = vmatprep.mubr.f32.mxu0 0.0
    %173 = vmatmul.mubr.f32.gmra.mrb[0].mxu0 %v91
    %v174 = vpop.f32.mrb[0].mxu0
    %v175 = vadd.f32 %v78, %v174
    %v176 = vpop.f32.mrb[0].mxu0
    %177 = vdwg.mxu0
    %v178 = vld [vmem:[%s1] sm:$0xff]
    %v179 = vld [vmem:[%s1 + $0x8] sm:$0xff]
    %v180 = vld [vmem:[%s1 + $0x10] sm:$0xff]
    %v181 = vld [vmem:[%s1 + $0x18] sm:$0xff]
    %v182 = vld [vmem:[%s1 + $0x20] sm:$0xff]
    %v183 = vld [vmem:[%s1 + $0x28] sm:$0xff]
    %v184 = vld [vmem:[%s1 + $0x30] sm:$0xff]
    %v185 = vld [vmem:[%s1 + $0x38] sm:$0xff]
    %190 = vrot.lane.b32.xlu0 %v61, 96
    %v191 = vpop.permute.xlu0 %190
    %192 = vrot.lane.b32.xlu0 %v63, 96
    %v193 = vpop.permute.xlu0 %192
    %194 = vrot.lane.b32.xlu0 %v65, 96
    %v195 = vpop.permute.xlu0 %194
    %196 = vrot.lane.b32.xlu0 %v67, 96
    %v197 = vpop.permute.xlu0 %196
    %202 = vrot.lane.b32.xlu0 %v78, 96
    %v203 = vpop.permute.xlu0 %202
    %v206 = vsel %vm80, %v178, 0
    %v209 = vsel %vm80, %v179, 0
    %v212 = vsel %vm80, %v180, 0
    %v215 = vsel %vm80, %v181, 0
    %v218 = vsel %vm80, %v182, 0
    %v221 = vsel %vm80, %v183, 0
    %v224 = vsel %vm80, %v184, 0
    %v227 = vsel %vm80, %v185, 0
    %229 = vmatprep.subr.mxu0 0.0
    %230 = vmatpush1.msra.mxu0 %v191
    %231 = vmatprep.subr.mxu0 0.0
    %232 = vmatpush1.msra.mxu0 %v193
    %233 = vmatprep.subr.mxu0 0.0
    %234 = vmatpush1.msra.mxu0 %v195
    %235 = vmatprep.subr.mxu0 0.0
    %236 = vmatpush1.msra.mxu0 %v197
    %237 = vmatprep.subr.mxu0 0.0
    %238 = vmatpush1.msra.mxu0 0.0
    %239 = vmatprep.subr.mxu0 0.0
    %240 = vmatpush1.msra.mxu0 0.0
    %241 = vmatprep.subr.mxu0 0.0
    %242 = vmatpush1.msra.mxu0 0.0
    %243 = vmatprep.subr.mxu0 0.0
    %244 = vmatpush1.msra.mxu0 0.0
    %245 = vmatprep.subr.mxu0 0.0
    %246 = vmatpush1.msra.mxu0 0.0
    %247 = vmatprep.subr.mxu0 0.0
    %248 = vmatpush1.msra.mxu0 0.0
    %249 = vmatprep.subr.mxu0 0.0
    %250 = vmatpush1.msra.mxu0 0.0
    %251 = vmatprep.subr.mxu0 0.0
    %252 = vmatpush1.msra.mxu0 0.0
    %253 = vmatprep.subr.mxu0 0.0
    %254 = vmatpush1.msra.mxu0 0.0
    %255 = vmatprep.subr.mxu0 0.0
    %256 = vmatpush1.msra.mxu0 0.0
    %257 = vmatprep.subr.mxu0 0.0
    %258 = vmatpush1.msra.mxu0 0.0
    %259 = vmatprep.subr.mxu0 0.0
    %260 = vmatpush1.msra.mxu0 0.0
    %261 = vmatprep.subr.mxu0 0.0
    %262 = vmatpush1.msra.mxu0 0.0
    %263 = vmatprep.subr.mxu0 0.0
    %264 = vmatpush1.msra.mxu0 0.0
    %265 = vmatprep.subr.mxu0 0.0
    %266 = vmatpush1.msra.mxu0 0.0
    %267 = vmatprep.subr.mxu0 0.0
    %268 = vmatpush1.msra.mxu0 0.0
    %269 = vmatprep.subr.mxu0 0.0
    %270 = vmatpush1.msra.mxu0 0.0
    %271 = vmatprep.subr.mxu0 0.0
    %272 = vmatpush1.msra.mxu0 0.0
    %273 = vmatprep.subr.mxu0 0.0
    %274 = vmatpush1.msra.mxu0 0.0
    %275 = vmatprep.subr.mxu0 0.0
    %276 = vmatpush1.msra.mxu0 0.0
    %277 = vmatprep.subr.mxu0 0.0
    %278 = vmatpush1.msra.mxu0 0.0
    %279 = vmatprep.subr.mxu0 0.0
    %280 = vmatpush1.msra.mxu0 0.0
    %281 = vmatprep.subr.mxu0 0.0
    %282 = vmatpush1.msra.mxu0 0.0
    %283 = vmatprep.subr.mxu0 0.0
    %284 = vmatpush1.msra.mxu0 0.0
    %285 = vmatprep.subr.mxu0 0.0
    %286 = vmatpush1.msra.mxu0 0.0
    %287 = vmatprep.subr.mxu0 0.0
    %288 = vmatpush1.msra.mxu0 0.0
    %289 = vmatprep.subr.mxu0 0.0
    %290 = vmatpush1.msra.mxu0 0.0
    %291 = vmatprep.subr.mxu0 0.0
    %292 = vmatpush1.msra.mxu0 0.0
    %293 = vmatprep.mubr.f32.mxu0 0.0
    %294 = vmatmul.mubr.f32.gmra.mrb[0].mxu0 %v206
    %v295 = vpop.f32.mrb[0].mxu0
    %v296 = vadd.f32 %v203, %v295
    %v297 = vpop.f32.mrb[0].mxu0
    %298 = vmatprep.mubr.f32.mxu0 0.0
    %299 = vmatmul.mubr.f32.gmra.mrb[0].mxu0 %v209
    %v300 = vpop.f32.mrb[0].mxu0
    %v301 = vadd.f32 %v203, %v300
    %v302 = vpop.f32.mrb[0].mxu0
    %303 = vmatprep.mubr.f32.mxu0 0.0
    %304 = vmatmul.mubr.f32.gmra.mrb[0].mxu0 %v212
    %v305 = vpop.f32.mrb[0].mxu0
    %v306 = vadd.f32 %v203, %v305
    %v307 = vpop.f32.mrb[0].mxu0
    %308 = vmatprep.mubr.f32.mxu0 0.0
    %309 = vmatmul.mubr.f32.gmra.mrb[0].mxu0 %v215
    %v310 = vpop.f32.mrb[0].mxu0
    %v311 = vadd.f32 %v203, %v310
    %v312 = vpop.f32.mrb[0].mxu0
    %313 = vmatprep.mubr.f32.mxu0 0.0
    %314 = vmatmul.mubr.f32.gmra.mrb[0].mxu0 %v218
    %v315 = vpop.f32.mrb[0].mxu0
    %v316 = vadd.f32 %v203, %v315
    %v317 = vpop.f32.mrb[0].mxu0
    %318 = vmatprep.mubr.f32.mxu0 0.0
    %319 = vmatmul.mubr.f32.gmra.mrb[0].mxu0 %v221
    %v320 = vpop.f32.mrb[0].mxu0
    %v321 = vadd.f32 %v203, %v320
    %v322 = vpop.f32.mrb[0].mxu0
    %323 = vmatprep.mubr.f32.mxu0 0.0
    %324 = vmatmul.mubr.f32.gmra.mrb[0].mxu0 %v224
    %v325 = vpop.f32.mrb[0].mxu0
    %v326 = vadd.f32 %v203, %v325
    %v327 = vpop.f32.mrb[0].mxu0
    %328 = vmatprep.mubr.f32.mxu0 0.0
    %329 = vmatmul.mubr.f32.gmra.mrb[0].mxu0 %v227
    %v330 = vpop.f32.mrb[0].mxu0
    %v331 = vadd.f32 %v203, %v330
    %v332 = vpop.f32.mrb[0].mxu0
    %333 = vdwg.mxu0
    %v334 = vld [vmem:[%s2] sm:$0xff]
    %v335 = vld [vmem:[%s2 + $0x8] sm:$0xff]
    %v336 = vld [vmem:[%s2 + $0x10] sm:$0xff]
    %v337 = vld [vmem:[%s2 + $0x18] sm:$0xff]
    %v338 = vld [vmem:[%s2 + $0x20] sm:$0xff]
    %v339 = vld [vmem:[%s2 + $0x28] sm:$0xff]
    %v340 = vld [vmem:[%s2 + $0x30] sm:$0xff]
    %v341 = vld [vmem:[%s2 + $0x38] sm:$0xff]
    %342 = vrot.lane.b32.xlu0 %v61, 64
    %v343 = vpop.permute.xlu0 %342
    %344 = vrot.lane.b32.xlu0 %v63, 64
    %v345 = vpop.permute.xlu0 %344
    %346 = vrot.lane.b32.xlu0 %v65, 64
    %v347 = vpop.permute.xlu0 %346
    %348 = vrot.lane.b32.xlu0 %v67, 64
    %v349 = vpop.permute.xlu0 %348
    %354 = vrot.lane.b32.xlu0 %v78, 64
    %v355 = vpop.permute.xlu0 %354
    %v358 = vsel %vm80, %v334, 0
    %v361 = vsel %vm80, %v335, 0
    %v364 = vsel %vm80, %v336, 0
    %v367 = vsel %vm80, %v337, 0
    %v370 = vsel %vm80, %v338, 0
    %v373 = vsel %vm80, %v339, 0
    %v376 = vsel %vm80, %v340, 0
    %v379 = vsel %vm80, %v341, 0
    %381 = vmatprep.subr.mxu0 0.0
    %382 = vmatpush1.msra.mxu0 %v343
    %383 = vmatprep.subr.mxu0 0.0
    %384 = vmatpush1.msra.mxu0 %v345
    %385 = vmatprep.subr.mxu0 0.0
    %386 = vmatpush1.msra.mxu0 %v347
    %387 = vmatprep.subr.mxu0 0.0
    %388 = vmatpush1.msra.mxu0 %v349
    %389 = vmatprep.subr.mxu0 0.0
    %390 = vmatpush1.msra.mxu0 0.0
    %391 = vmatprep.subr.mxu0 0.0
    %392 = vmatpush1.msra.mxu0 0.0
    %393 = vmatprep.subr.mxu0 0.0
    %394 = vmatpush1.msra.mxu0 0.0
    %395 = vmatprep.subr.mxu0 0.0
    %396 = vmatpush1.msra.mxu0 0.0
    %397 = vmatprep.subr.mxu0 0.0
    %398 = vmatpush1.msra.mxu0 0.0
    %399 = vmatprep.subr.mxu0 0.0
    %400 = vmatpush1.msra.mxu0 0.0
    %401 = vmatprep.subr.mxu0 0.0
    %402 = vmatpush1.msra.mxu0 0.0
    %403 = vmatprep.subr.mxu0 0.0
    %404 = vmatpush1.msra.mxu0 0.0
    %405 = vmatprep.subr.mxu0 0.0
    %406 = vmatpush1.msra.mxu0 0.0
    %407 = vmatprep.subr.mxu0 0.0
    %408 = vmatpush1.msra.mxu0 0.0
    %409 = vmatprep.subr.mxu0 0.0
    %410 = vmatpush1.msra.mxu0 0.0
    %411 = vmatprep.subr.mxu0 0.0
    %412 = vmatpush1.msra.mxu0 0.0
    %413 = vmatprep.subr.mxu0 0.0
    %414 = vmatpush1.msra.mxu0 0.0
    %415 = vmatprep.subr.mxu0 0.0
    %416 = vmatpush1.msra.mxu0 0.0
    %417 = vmatprep.subr.mxu0 0.0
    %418 = vmatpush1.msra.mxu0 0.0
    %419 = vmatprep.subr.mxu0 0.0
    %420 = vmatpush1.msra.mxu0 0.0
    %421 = vmatprep.subr.mxu0 0.0
    %422 = vmatpush1.msra.mxu0 0.0
    %423 = vmatprep.subr.mxu0 0.0
    %424 = vmatpush1.msra.mxu0 0.0
    %425 = vmatprep.subr.mxu0 0.0
    %426 = vmatpush1.msra.mxu0 0.0
    %427 = vmatprep.subr.mxu0 0.0
    %428 = vmatpush1.msra.mxu0 0.0
    %429 = vmatprep.subr.mxu0 0.0
    %430 = vmatpush1.msra.mxu0 0.0
    %431 = vmatprep.subr.mxu0 0.0
    %432 = vmatpush1.msra.mxu0 0.0
    %433 = vmatprep.subr.mxu0 0.0
    %434 = vmatpush1.msra.mxu0 0.0
    %435 = vmatprep.subr.mxu0 0.0
    %436 = vmatpush1.msra.mxu0 0.0
    %437 = vmatprep.subr.mxu0 0.0
    %438 = vmatpush1.msra.mxu0 0.0
    %439 = vmatprep.subr.mxu0 0.0
    %440 = vmatpush1.msra.mxu0 0.0
    %441 = vmatprep.subr.mxu0 0.0
    %442 = vmatpush1.msra.mxu0 0.0
    %443 = vmatprep.subr.mxu0 0.0
    %444 = vmatpush1.msra.mxu0 0.0
    %445 = vmatprep.mubr.f32.mxu0 0.0
    %446 = vmatmul.mubr.f32.gmra.mrb[0].mxu0 %v358
    %v447 = vpop.f32.mrb[0].mxu0
    %v448 = vadd.f32 %v355, %v447
    %v449 = vpop.f32.mrb[0].mxu0
    %450 = vmatprep.mubr.f32.mxu0 0.0
    %451 = vmatmul.mubr.f32.gmra.mrb[0].mxu0 %v361
    %v452 = vpop.f32.mrb[0].mxu0
    %v453 = vadd.f32 %v355, %v452
    %v454 = vpop.f32.mrb[0].mxu0
    %455 = vmatprep.mubr.f32.mxu0 0.0
    %456 = vmatmul.mubr.f32.gmra.mrb[0].mxu0 %v364
    %v457 = vpop.f32.mrb[0].mxu0
    %v458 = vadd.f32 %v355, %v457
    %v459 = vpop.f32.mrb[0].mxu0
    %460 = vmatprep.mubr.f32.mxu0 0.0
    %461 = vmatmul.mubr.f32.gmra.mrb[0].mxu0 %v367
    %v462 = vpop.f32.mrb[0].mxu0
    %v463 = vadd.f32 %v355, %v462
    %v464 = vpop.f32.mrb[0].mxu0
    %465 = vmatprep.mubr.f32.mxu0 0.0
    %466 = vmatmul.mubr.f32.gmra.mrb[0].mxu0 %v370
    %v467 = vpop.f32.mrb[0].mxu0
    %v468 = vadd.f32 %v355, %v467
    %v469 = vpop.f32.mrb[0].mxu0
    %470 = vmatprep.mubr.f32.mxu0 0.0
    %471 = vmatmul.mubr.f32.gmra.mrb[0].mxu0 %v373
    %v472 = vpop.f32.mrb[0].mxu0
    %v473 = vadd.f32 %v355, %v472
    %v474 = vpop.f32.mrb[0].mxu0
    %475 = vmatprep.mubr.f32.mxu0 0.0
    %476 = vmatmul.mubr.f32.gmra.mrb[0].mxu0 %v376
    %v477 = vpop.f32.mrb[0].mxu0
    %v478 = vadd.f32 %v355, %v477
    %v479 = vpop.f32.mrb[0].mxu0
    %480 = vmatprep.mubr.f32.mxu0 0.0
    %481 = vmatmul.mubr.f32.gmra.mrb[0].mxu0 %v379
    %v482 = vpop.f32.mrb[0].mxu0
    %v483 = vadd.f32 %v355, %v482
    %v484 = vpop.f32.mrb[0].mxu0
    %485 = vdwg.mxu0
    %v486 = vmul.f32 %v160, 0.35355338
    %v487 = vmul.f32 %v165, 0.35355338
    %v488 = vmul.f32 %v170, 0.35355338
    %v489 = vmul.f32 %v175, 0.35355338
    %v490 = vld [vmem:[%s6] sm:$0xff]
    %v491 = vld [vmem:[%s6 + $0x8] sm:$0xff]
    %v492 = vld [vmem:[%s6 + $0x10] sm:$0xff]
    %v493 = vld [vmem:[%s6 + $0x18] sm:$0xff]
    %v494 = vld [vmem:[%s6 + $0x20] sm:$0xff]
    %v495 = vld [vmem:[%s6 + $0x28] sm:$0xff]
    %v496 = vld [vmem:[%s6 + $0x30] sm:$0xff]
    %v497 = vld [vmem:[%s6 + $0x38] sm:$0xff]
    %v498 = vld [vmem:[%s6 + $0x40] sm:$0xff]
    %v499 = vld [vmem:[%s6 + $0x48] sm:$0xff]
    %v500 = vld [vmem:[%s6 + $0x50] sm:$0xff]
    %v501 = vld [vmem:[%s6 + $0x58] sm:$0xff]
    %v502 = vld [vmem:[%s6 + $0x60] sm:$0xff]
    %v503 = vld [vmem:[%s6 + $0x68] sm:$0xff]
    %v504 = vld [vmem:[%s6 + $0x70] sm:$0xff]
    %v505 = vld [vmem:[%s6 + $0x78] sm:$0xff]
    %v506 = vld [vmem:[%s6 + $0x80] sm:$0xff]
    %v507 = vld [vmem:[%s6 + $0x88] sm:$0xff]
    %v508 = vld [vmem:[%s6 + $0x90] sm:$0xff]
    %v509 = vld [vmem:[%s6 + $0x98] sm:$0xff]
    %v510 = vld [vmem:[%s6 + $0xa0] sm:$0xff]
    %v511 = vld [vmem:[%s6 + $0xa8] sm:$0xff]
    %v512 = vld [vmem:[%s6 + $0xb0] sm:$0xff]
    %v513 = vld [vmem:[%s6 + $0xb8] sm:$0xff]
    %v514 = vld [vmem:[%s6 + $0xc0] sm:$0xff]
    %v515 = vld [vmem:[%s6 + $0xc8] sm:$0xff]
    %v516 = vld [vmem:[%s6 + $0xd0] sm:$0xff]
    %v517 = vld [vmem:[%s6 + $0xd8] sm:$0xff]
    %v518 = vld [vmem:[%s6 + $0xe0] sm:$0xff]
    %v519 = vld [vmem:[%s6 + $0xe8] sm:$0xff]
    %v520 = vld [vmem:[%s6 + $0xf0] sm:$0xff]
    %v521 = vld [vmem:[%s6 + $0xf8] sm:$0xff]
    %v522 = vmul.f32 %v296, %v490
    %v523 = vmul.f32 %v301, %v491
    %v524 = vmul.f32 %v306, %v492
    %v525 = vmul.f32 %v311, %v493
    %v526 = vmul.f32 %v316, %v494
    %v527 = vmul.f32 %v321, %v495
    %v528 = vmul.f32 %v326, %v496
    %v529 = vmul.f32 %v331, %v497
    %v530 = vmul.f32 %v296, %v498
    %v531 = vmul.f32 %v301, %v499
    %v532 = vmul.f32 %v306, %v500
    %v533 = vmul.f32 %v311, %v501
    %v534 = vmul.f32 %v316, %v502
    %v535 = vmul.f32 %v321, %v503
    %v536 = vmul.f32 %v326, %v504
    %v537 = vmul.f32 %v331, %v505
    %v538 = vmul.f32 %v296, %v506
    %v539 = vmul.f32 %v301, %v507
    %v540 = vmul.f32 %v306, %v508
    %v541 = vmul.f32 %v311, %v509
    %v542 = vmul.f32 %v316, %v510
    %v543 = vmul.f32 %v321, %v511
    %v544 = vmul.f32 %v326, %v512
    %v545 = vmul.f32 %v331, %v513
    %v546 = vmul.f32 %v296, %v514
    %v547 = vmul.f32 %v301, %v515
    %v548 = vmul.f32 %v306, %v516
    %v549 = vmul.f32 %v311, %v517
    %v550 = vmul.f32 %v316, %v518
    %v551 = vmul.f32 %v321, %v519
    %v552 = vmul.f32 %v326, %v520
    %v553 = vmul.f32 %v331, %v521
    %v554 = vmul.f32 %v448, %v490
    %v555 = vmul.f32 %v453, %v491
    %v556 = vmul.f32 %v458, %v492
    %v557 = vmul.f32 %v463, %v493
    %v558 = vmul.f32 %v468, %v494
    %v559 = vmul.f32 %v473, %v495
    %v560 = vmul.f32 %v478, %v496
    %v561 = vmul.f32 %v483, %v497
    %v562 = vmul.f32 %v448, %v498
    %v563 = vmul.f32 %v453, %v499
    %v564 = vmul.f32 %v458, %v500
    %v565 = vmul.f32 %v463, %v501
    %v566 = vmul.f32 %v468, %v502
    %v567 = vmul.f32 %v473, %v503
    %v568 = vmul.f32 %v478, %v504
    %v569 = vmul.f32 %v483, %v505
    %v570 = vmul.f32 %v448, %v506
    %v571 = vmul.f32 %v453, %v507
    %v572 = vmul.f32 %v458, %v508
    %v573 = vmul.f32 %v463, %v509
    %v574 = vmul.f32 %v468, %v510
    %v575 = vmul.f32 %v473, %v511
    %v576 = vmul.f32 %v478, %v512
    %v577 = vmul.f32 %v483, %v513
    %v578 = vmul.f32 %v448, %v514
    %v579 = vmul.f32 %v453, %v515
    %v580 = vmul.f32 %v458, %v516
    %v581 = vmul.f32 %v463, %v517
    %v582 = vmul.f32 %v468, %v518
    %v583 = vmul.f32 %v473, %v519
    %v584 = vmul.f32 %v478, %v520
    %v585 = vmul.f32 %v483, %v521
    %v586 = vld [vmem:[%s5] sm:$0xff]
    %v587 = vld [vmem:[%s5 + $0x8] sm:$0xff]
    %v588 = vld [vmem:[%s5 + $0x10] sm:$0xff]
    %v589 = vld [vmem:[%s5 + $0x18] sm:$0xff]
    %v590 = vld [vmem:[%s5 + $0x20] sm:$0xff]
    %v591 = vld [vmem:[%s5 + $0x28] sm:$0xff]
    %v592 = vld [vmem:[%s5 + $0x30] sm:$0xff]
    %v593 = vld [vmem:[%s5 + $0x38] sm:$0xff]
    %v594 = vld [vmem:[%s5 + $0x40] sm:$0xff]
    %v595 = vld [vmem:[%s5 + $0x48] sm:$0xff]
    %v596 = vld [vmem:[%s5 + $0x50] sm:$0xff]
    %v597 = vld [vmem:[%s5 + $0x58] sm:$0xff]
    %v598 = vld [vmem:[%s5 + $0x60] sm:$0xff]
    %v599 = vld [vmem:[%s5 + $0x68] sm:$0xff]
    %v600 = vld [vmem:[%s5 + $0x70] sm:$0xff]
    %v601 = vld [vmem:[%s5 + $0x78] sm:$0xff]
    %v602 = vld [vmem:[%s5 + $0x80] sm:$0xff]
    %v603 = vld [vmem:[%s5 + $0x88] sm:$0xff]
    %v604 = vld [vmem:[%s5 + $0x90] sm:$0xff]
    %v605 = vld [vmem:[%s5 + $0x98] sm:$0xff]
    %v606 = vld [vmem:[%s5 + $0xa0] sm:$0xff]
    %v607 = vld [vmem:[%s5 + $0xa8] sm:$0xff]
    %v608 = vld [vmem:[%s5 + $0xb0] sm:$0xff]
    %v609 = vld [vmem:[%s5 + $0xb8] sm:$0xff]
    %v610 = vld [vmem:[%s5 + $0xc0] sm:$0xff]
    %v611 = vld [vmem:[%s5 + $0xc8] sm:$0xff]
    %v612 = vld [vmem:[%s5 + $0xd0] sm:$0xff]
    %v613 = vld [vmem:[%s5 + $0xd8] sm:$0xff]
    %v614 = vld [vmem:[%s5 + $0xe0] sm:$0xff]
    %v615 = vld [vmem:[%s5 + $0xe8] sm:$0xff]
    %v616 = vld [vmem:[%s5 + $0xf0] sm:$0xff]
    %v617 = vld [vmem:[%s5 + $0xf8] sm:$0xff]
    %v619 = vsel %vm80, %v486, 0
    %v622 = vsel %vm80, %v487, 0
    %v625 = vsel %vm80, %v488, 0
    %v628 = vsel %vm80, %v489, 0
    %v631 = vsel %vm80, %v522, 0
    %v634 = vsel %vm80, %v523, 0
    %v637 = vsel %vm80, %v524, 0
    %v640 = vsel %vm80, %v525, 0
    %v643 = vsel %vm80, %v526, 0
    %v646 = vsel %vm80, %v527, 0
    %v649 = vsel %vm80, %v528, 0
    %v652 = vsel %vm80, %v529, 0
    %v655 = vsel %vm80, %v530, 0
    %v658 = vsel %vm80, %v531, 0
    %v661 = vsel %vm80, %v532, 0
    %v664 = vsel %vm80, %v533, 0
    %v667 = vsel %vm80, %v534, 0
    %v670 = vsel %vm80, %v535, 0
    %v673 = vsel %vm80, %v536, 0
    %v676 = vsel %vm80, %v537, 0
    %v679 = vsel %vm80, %v538, 0
    %v682 = vsel %vm80, %v539, 0
    %v685 = vsel %vm80, %v540, 0
    %v688 = vsel %vm80, %v541, 0
    %v691 = vsel %vm80, %v542, 0
    %v694 = vsel %vm80, %v543, 0
    %v697 = vsel %vm80, %v544, 0
    %v700 = vsel %vm80, %v545, 0
    %v703 = vsel %vm80, %v546, 0
    %v706 = vsel %vm80, %v547, 0
    %v709 = vsel %vm80, %v548, 0
    %v712 = vsel %vm80, %v549, 0
    %v715 = vsel %vm80, %v550, 0
    %v718 = vsel %vm80, %v551, 0
    %v721 = vsel %vm80, %v552, 0
    %v724 = vsel %vm80, %v553, 0
    %726 = vmatprep.subr.mxu0 0.0
    %727 = vmatpush1.xpose.msra.mxu0 %v631
    %728 = vmatprep.subr.mxu0 0.0
    %729 = vmatpush1.xpose.msra.mxu0 %v634
    %730 = vmatprep.subr.mxu0 0.0
    %731 = vmatpush1.xpose.msra.mxu0 %v637
    %732 = vmatprep.subr.mxu0 0.0
    %733 = vmatpush1.xpose.msra.mxu0 %v640
    %734 = vmatprep.subr.mxu0 0.0
    %735 = vmatpush1.xpose.msra.mxu0 %v643
    %736 = vmatprep.subr.mxu0 0.0
    %737 = vmatpush1.xpose.msra.mxu0 %v646
    %738 = vmatprep.subr.mxu0 0.0
    %739 = vmatpush1.xpose.msra.mxu0 %v649
    %740 = vmatprep.subr.mxu0 0.0
    %741 = vmatpush1.xpose.msra.mxu0 %v652
    %742 = vmatprep.subr.mxu0 0.0
    %743 = vmatpush1.xpose.msra.mxu0 %v655
    %744 = vmatprep.subr.mxu0 0.0
    %745 = vmatpush1.xpose.msra.mxu0 %v658
    %746 = vmatprep.subr.mxu0 0.0
    %747 = vmatpush1.xpose.msra.mxu0 %v661
    %748 = vmatprep.subr.mxu0 0.0
    %749 = vmatpush1.xpose.msra.mxu0 %v664
    %750 = vmatprep.subr.mxu0 0.0
    %751 = vmatpush1.xpose.msra.mxu0 %v667
    %752 = vmatprep.subr.mxu0 0.0
    %753 = vmatpush1.xpose.msra.mxu0 %v670
    %754 = vmatprep.subr.mxu0 0.0
    %755 = vmatpush1.xpose.msra.mxu0 %v673
    %756 = vmatprep.subr.mxu0 0.0
    %757 = vmatpush1.xpose.msra.mxu0 %v676
    %758 = vmatprep.subr.mxu0 0.0
    %759 = vmatpush1.xpose.msra.mxu0 %v679
    %760 = vmatprep.subr.mxu0 0.0
    %761 = vmatpush1.xpose.msra.mxu0 %v682
    %762 = vmatprep.subr.mxu0 0.0
    %763 = vmatpush1.xpose.msra.mxu0 %v685
    %764 = vmatprep.subr.mxu0 0.0
    %765 = vmatpush1.xpose.msra.mxu0 %v688
    %766 = vmatprep.subr.mxu0 0.0
    %767 = vmatpush1.xpose.msra.mxu0 %v691
    %768 = vmatprep.subr.mxu0 0.0
    %769 = vmatpush1.xpose.msra.mxu0 %v694
    %770 = vmatprep.subr.mxu0 0.0
    %771 = vmatpush1.xpose.msra.mxu0 %v697
    %772 = vmatprep.subr.mxu0 0.0
    %773 = vmatpush1.xpose.msra.mxu0 %v700
    %774 = vmatprep.subr.mxu0 0.0
    %775 = vmatpush1.xpose.msra.mxu0 %v703
    %776 = vmatprep.subr.mxu0 0.0
    %777 = vmatpush1.xpose.msra.mxu0 %v706
    %778 = vmatprep.subr.mxu0 0.0
    %779 = vmatpush1.xpose.msra.mxu0 %v709
    %780 = vmatprep.subr.mxu0 0.0
    %781 = vmatpush1.xpose.msra.mxu0 %v712
    %782 = vmatprep.subr.mxu0 0.0
    %783 = vmatpush1.xpose.msra.mxu0 %v715
    %784 = vmatprep.subr.mxu0 0.0
    %785 = vmatpush1.xpose.msra.mxu0 %v718
    %786 = vmatprep.subr.mxu0 0.0
    %787 = vmatpush1.xpose.msra.mxu0 %v721
    %788 = vmatprep.subr.mxu0 0.0
    %789 = vmatpush1.xpose.msra.mxu0 %v724
    %790 = vmatprep.mubr.f32.mxu0 0.0
    %791 = vmatmul.mubr.f32.gmra.mrb[0].mxu0 %v619
    %v792 = vpop.f32.mrb[0].mxu0
    %v793 = vadd.f32 %v586, %v792
    %v794 = vpop.f32.mrb[0].mxu0
    %v795 = vadd.f32 %v587, %v794
    %796 = vmatprep.mubr.f32.mxu0 0.0
    %797 = vmatmul.mubr.f32.gmra.mrb[0].mxu0 %v622
    %v798 = vpop.f32.mrb[0].mxu0
    %v799 = vadd.f32 %v588, %v798
    %v800 = vpop.f32.mrb[0].mxu0
    %v801 = vadd.f32 %v589, %v800
    %802 = vmatprep.mubr.f32.mxu0 0.0
    %803 = vmatmul.mubr.f32.gmra.mrb[0].mxu0 %v625
    %v804 = vpop.f32.mrb[0].mxu0
    %v805 = vadd.f32 %v590, %v804
    %v806 = vpop.f32.mrb[0].mxu0
    %v807 = vadd.f32 %v591, %v806
    %808 = vmatprep.mubr.f32.mxu0 0.0
    %809 = vmatmul.mubr.f32.gmra.mrb[0].mxu0 %v628
    %v810 = vpop.f32.mrb[0].mxu0
    %v811 = vadd.f32 %v592, %v810
    %v812 = vpop.f32.mrb[0].mxu0
    %v813 = vadd.f32 %v593, %v812
    %814 = vmatprep.mubr.f32.mxu0 0.0
    %815 = vmatmul.mubr.f32.gmra.mrb[0].mxu0 %v619
    %v816 = vpop.f32.mrb[0].mxu0
    %v817 = vadd.f32 %v594, %v816
    %v818 = vpop.f32.mrb[0].mxu0
    %v819 = vadd.f32 %v595, %v818
    %820 = vmatprep.mubr.f32.mxu0 0.0
    %821 = vmatmul.mubr.f32.gmra.mrb[0].mxu0 %v622
    %v822 = vpop.f32.mrb[0].mxu0
    %v823 = vadd.f32 %v596, %v822
    %v824 = vpop.f32.mrb[0].mxu0
    %v825 = vadd.f32 %v597, %v824
    %826 = vmatprep.mubr.f32.mxu0 0.0
    %827 = vmatmul.mubr.f32.gmra.mrb[0].mxu0 %v625
    %v828 = vpop.f32.mrb[0].mxu0
    %v829 = vadd.f32 %v598, %v828
    %v830 = vpop.f32.mrb[0].mxu0
    %v831 = vadd.f32 %v599, %v830
    %832 = vmatprep.mubr.f32.mxu0 0.0
    %833 = vmatmul.mubr.f32.gmra.mrb[0].mxu0 %v628
    %v834 = vpop.f32.mrb[0].mxu0
    %v835 = vadd.f32 %v600, %v834
    %v836 = vpop.f32.mrb[0].mxu0
    %v837 = vadd.f32 %v601, %v836
    %838 = vmatprep.mubr.f32.mxu0 0.0
    %839 = vmatmul.mubr.f32.gmra.mrb[0].mxu0 %v619
    %v840 = vpop.f32.mrb[0].mxu0
    %v841 = vadd.f32 %v602, %v840
    %v842 = vpop.f32.mrb[0].mxu0
    %v843 = vadd.f32 %v603, %v842
    %844 = vmatprep.mubr.f32.mxu0 0.0
    %845 = vmatmul.mubr.f32.gmra.mrb[0].mxu0 %v622
    %v846 = vpop.f32.mrb[0].mxu0
    %v847 = vadd.f32 %v604, %v846
    %v848 = vpop.f32.mrb[0].mxu0
    %v849 = vadd.f32 %v605, %v848
    %850 = vmatprep.mubr.f32.mxu0 0.0
    %851 = vmatmul.mubr.f32.gmra.mrb[0].mxu0 %v625
    %v852 = vpop.f32.mrb[0].mxu0
    %v853 = vadd.f32 %v606, %v852
    %v854 = vpop.f32.mrb[0].mxu0
    %v855 = vadd.f32 %v607, %v854
    %856 = vmatprep.mubr.f32.mxu0 0.0
    %857 = vmatmul.mubr.f32.gmra.mrb[0].mxu0 %v628
    %v858 = vpop.f32.mrb[0].mxu0
    %v859 = vadd.f32 %v608, %v858
    %v860 = vpop.f32.mrb[0].mxu0
    %v861 = vadd.f32 %v609, %v860
    %862 = vmatprep.mubr.f32.mxu0 0.0
    %863 = vmatmul.mubr.f32.gmra.mrb[0].mxu0 %v619
    %v864 = vpop.f32.mrb[0].mxu0
    %v865 = vadd.f32 %v610, %v864
    %v866 = vpop.f32.mrb[0].mxu0
    %v867 = vadd.f32 %v611, %v866
    %868 = vmatprep.mubr.f32.mxu0 0.0
    %869 = vmatmul.mubr.f32.gmra.mrb[0].mxu0 %v622
    %v870 = vpop.f32.mrb[0].mxu0
    %v871 = vadd.f32 %v612, %v870
    %v872 = vpop.f32.mrb[0].mxu0
    %v873 = vadd.f32 %v613, %v872
    %874 = vmatprep.mubr.f32.mxu0 0.0
    %875 = vmatmul.mubr.f32.gmra.mrb[0].mxu0 %v625
    %v876 = vpop.f32.mrb[0].mxu0
    %v877 = vadd.f32 %v614, %v876
    %v878 = vpop.f32.mrb[0].mxu0
    %v879 = vadd.f32 %v615, %v878
    %880 = vmatprep.mubr.f32.mxu0 0.0
    %881 = vmatmul.mubr.f32.gmra.mrb[0].mxu0 %v628
    %v882 = vpop.f32.mrb[0].mxu0
    %v883 = vadd.f32 %v616, %v882
    %v884 = vpop.f32.mrb[0].mxu0
    %v885 = vadd.f32 %v617, %v884
    %886 = vdwg.mxu0
    %v887 = vmax.f32 %v793, %v795
    %888 = vmax.xlane.f32.xlu0 %v887
    %v889 = vpop.xlane.xlu0 %888
    %v890 = vmax.f32 %v799, %v801
    %891 = vmax.xlane.f32.xlu0 %v890
    %v892 = vpop.xlane.xlu0 %891
    %v893 = vmax.f32 %v805, %v807
    %894 = vmax.xlane.f32.xlu0 %v893
    %v895 = vpop.xlane.xlu0 %894
    %v896 = vmax.f32 %v811, %v813
    %897 = vmax.xlane.f32.xlu0 %v896
    %v898 = vpop.xlane.xlu0 %897
    %v899 = vmax.f32 %v817, %v819
    %900 = vmax.xlane.f32.xlu0 %v899
    %v901 = vpop.xlane.xlu0 %900
    %v902 = vmax.f32 %v823, %v825
    %903 = vmax.xlane.f32.xlu0 %v902
    %v904 = vpop.xlane.xlu0 %903
    %v905 = vmax.f32 %v829, %v831
    %906 = vmax.xlane.f32.xlu0 %v905
    %v907 = vpop.xlane.xlu0 %906
    %v908 = vmax.f32 %v835, %v837
    %909 = vmax.xlane.f32.xlu0 %v908
    %v910 = vpop.xlane.xlu0 %909
    %v911 = vmax.f32 %v841, %v843
    %912 = vmax.xlane.f32.xlu0 %v911
    %v913 = vpop.xlane.xlu0 %912
    %v914 = vmax.f32 %v847, %v849
    %915 = vmax.xlane.f32.xlu0 %v914
    %v916 = vpop.xlane.xlu0 %915
    %v917 = vmax.f32 %v853, %v855
    %918 = vmax.xlane.f32.xlu0 %v917
    %v919 = vpop.xlane.xlu0 %918
    %v920 = vmax.f32 %v859, %v861
    %921 = vmax.xlane.f32.xlu0 %v920
    %v922 = vpop.xlane.xlu0 %921
    %v923 = vmax.f32 %v865, %v867
    %924 = vmax.xlane.f32.xlu0 %v923
    %v925 = vpop.xlane.xlu0 %924
    %v926 = vmax.f32 %v871, %v873
    %927 = vmax.xlane.f32.xlu0 %v926
    %v928 = vpop.xlane.xlu0 %927
    %v929 = vmax.f32 %v877, %v879
    %930 = vmax.xlane.f32.xlu0 %v929
    %v931 = vpop.xlane.xlu0 %930
    %v932 = vmax.f32 %v883, %v885
    %933 = vmax.xlane.f32.xlu0 %v932
    %v934 = vpop.xlane.xlu0 %933
    %v935 = vsub.f32 %v793, %v889
    %v936 = vsub.f32 %v795, %v889
    %v937 = vsub.f32 %v799, %v892
    %v938 = vsub.f32 %v801, %v892
    %v939 = vsub.f32 %v805, %v895
    %v940 = vsub.f32 %v807, %v895
    %v941 = vsub.f32 %v811, %v898
    %v942 = vsub.f32 %v813, %v898
    %v943 = vsub.f32 %v817, %v901
    %v944 = vsub.f32 %v819, %v901
    %v945 = vsub.f32 %v823, %v904
    %v946 = vsub.f32 %v825, %v904
    %v947 = vsub.f32 %v829, %v907
    %v948 = vsub.f32 %v831, %v907
    %v949 = vsub.f32 %v835, %v910
    %v950 = vsub.f32 %v837, %v910
    %v951 = vsub.f32 %v841, %v913
    %v952 = vsub.f32 %v843, %v913
    %v953 = vsub.f32 %v847, %v916
    %v954 = vsub.f32 %v849, %v916
    %v955 = vsub.f32 %v853, %v919
    %v956 = vsub.f32 %v855, %v919
    %v957 = vsub.f32 %v859, %v922
    %v958 = vsub.f32 %v861, %v922
    %v959 = vsub.f32 %v865, %v925
    %v960 = vsub.f32 %v867, %v925
    %v961 = vsub.f32 %v871, %v928
    %v962 = vsub.f32 %v873, %v928
    %v963 = vsub.f32 %v877, %v931
    %v964 = vsub.f32 %v879, %v931
    %v965 = vsub.f32 %v883, %v934
    %v966 = vsub.f32 %v885, %v934
    %v967 = vmul.f32 %v935, 1.442695
    %v968 = vpow.pop %v967
    %v969 = vmul.f32 %v936, 1.442695
    %v970 = vpow.pop %v969
    %v971 = vmul.f32 %v937, 1.442695
    %v972 = vpow.pop %v971
    %v973 = vmul.f32 %v938, 1.442695
    %v974 = vpow.pop %v973
    %v975 = vmul.f32 %v939, 1.442695
    %v976 = vpow.pop %v975
    %v977 = vmul.f32 %v940, 1.442695
    %v978 = vpow.pop %v977
    %v979 = vmul.f32 %v941, 1.442695
    %v980 = vpow.pop %v979
    %v981 = vmul.f32 %v942, 1.442695
    %v982 = vpow.pop %v981
    %v983 = vmul.f32 %v943, 1.442695
    %v984 = vpow.pop %v983
    %v985 = vmul.f32 %v944, 1.442695
    %v986 = vpow.pop %v985
    %v987 = vmul.f32 %v945, 1.442695
    %v988 = vpow.pop %v987
    %v989 = vmul.f32 %v946, 1.442695
    %v990 = vpow.pop %v989
    %v991 = vmul.f32 %v947, 1.442695
    %v992 = vpow.pop %v991
    %v993 = vmul.f32 %v948, 1.442695
    %v994 = vpow.pop %v993
    %v995 = vmul.f32 %v949, 1.442695
    %v996 = vpow.pop %v995
    %v997 = vmul.f32 %v950, 1.442695
    %v998 = vpow.pop %v997
    %v999 = vmul.f32 %v951, 1.442695
    %v1000 = vpow.pop %v999
    %v1001 = vmul.f32 %v952, 1.442695
    %v1002 = vpow.pop %v1001
    %v1003 = vmul.f32 %v953, 1.442695
    %v1004 = vpow.pop %v1003
    %v1005 = vmul.f32 %v954, 1.442695
    %v1006 = vpow.pop %v1005
    %v1007 = vmul.f32 %v955, 1.442695
    %v1008 = vpow.pop %v1007
    %v1009 = vmul.f32 %v956, 1.442695
    %v1010 = vpow.pop %v1009
    %v1011 = vmul.f32 %v957, 1.442695
    %v1012 = vpow.pop %v1011
    %v1013 = vmul.f32 %v958, 1.442695
    %v1014 = vpow.pop %v1013
    %v1015 = vmul.f32 %v959, 1.442695
    %v1016 = vpow.pop %v1015
    %v1017 = vmul.f32 %v960, 1.442695
    %v1018 = vpow.pop %v1017
    %v1019 = vmul.f32 %v961, 1.442695
    %v1020 = vpow.pop %v1019
    %v1021 = vmul.f32 %v962, 1.442695
    %v1022 = vpow.pop %v1021
    %v1023 = vmul.f32 %v963, 1.442695
    %v1024 = vpow.pop %v1023
    %v1025 = vmul.f32 %v964, 1.442695
    %v1026 = vpow.pop %v1025
    %v1027 = vmul.f32 %v965, 1.442695
    %v1028 = vpow.pop %v1027
    %v1029 = vmul.f32 %v966, 1.442695
    %v1030 = vpow.pop %v1029
    %v1031 = vadd.f32 %v968, %v970
    %1032 = vadd.xlane.f32.xlu0 %v1031
    %v1033 = vpop.xlane.xlu0 %1032
    %v1034 = vadd.f32 %v972, %v974
    %1035 = vadd.xlane.f32.xlu0 %v1034
    %v1036 = vpop.xlane.xlu0 %1035
    %v1037 = vadd.f32 %v976, %v978
    %1038 = vadd.xlane.f32.xlu0 %v1037
    %v1039 = vpop.xlane.xlu0 %1038
    %v1040 = vadd.f32 %v980, %v982
    %1041 = vadd.xlane.f32.xlu0 %v1040
    %v1042 = vpop.xlane.xlu0 %1041
    %v1043 = vadd.f32 %v984, %v986
    %1044 = vadd.xlane.f32.xlu0 %v1043
    %v1045 = vpop.xlane.xlu0 %1044
    %v1046 = vadd.f32 %v988, %v990
    %1047 = vadd.xlane.f32.xlu0 %v1046
    %v1048 = vpop.xlane.xlu0 %1047
    %v1049 = vadd.f32 %v992, %v994
    %1050 = vadd.xlane.f32.xlu0 %v1049
    %v1051 = vpop.xlane.xlu0 %1050
    %v1052 = vadd.f32 %v996, %v998
    %1053 = vadd.xlane.f32.xlu0 %v1052
    %v1054 = vpop.xlane.xlu0 %1053
    %v1055 = vadd.f32 %v1000, %v1002
    %1056 = vadd.xlane.f32.xlu0 %v1055
    %v1057 = vpop.xlane.xlu0 %1056
    %v1058 = vadd.f32 %v1004, %v1006
    %1059 = vadd.xlane.f32.xlu0 %v1058
    %v1060 = vpop.xlane.xlu0 %1059
    %v1061 = vadd.f32 %v1008, %v1010
    %1062 = vadd.xlane.f32.xlu0 %v1061
    %v1063 = vpop.xlane.xlu0 %1062
    %v1064 = vadd.f32 %v1012, %v1014
    %1065 = vadd.xlane.f32.xlu0 %v1064
    %v1066 = vpop.xlane.xlu0 %1065
    %v1067 = vadd.f32 %v1016, %v1018
    %1068 = vadd.xlane.f32.xlu0 %v1067
    %v1069 = vpop.xlane.xlu0 %1068
    %v1070 = vadd.f32 %v1020, %v1022
    %1071 = vadd.xlane.f32.xlu0 %v1070
    %v1072 = vpop.xlane.xlu0 %1071
    %v1073 = vadd.f32 %v1024, %v1026
    %1074 = vadd.xlane.f32.xlu0 %v1073
    %v1075 = vpop.xlane.xlu0 %1074
    %v1076 = vadd.f32 %v1028, %v1030
    %1077 = vadd.xlane.f32.xlu0 %v1076
    %v1078 = vpop.xlane.xlu0 %1077
    %v1079 = vrcp.pop %v1033
    %v1080 = vrcp.pop %v1036
    %v1081 = vrcp.pop %v1039
    %v1082 = vrcp.pop %v1042
    %v1083 = vrcp.pop %v1045
    %v1084 = vrcp.pop %v1048
    %v1085 = vrcp.pop %v1051
    %v1086 = vrcp.pop %v1054
    %v1087 = vrcp.pop %v1057
    %v1088 = vrcp.pop %v1060
    %v1089 = vrcp.pop %v1063
    %v1090 = vrcp.pop %v1066
    %v1091 = vrcp.pop %v1069
    %v1092 = vrcp.pop %v1072
    %v1093 = vrcp.pop %v1075
    %v1094 = vrcp.pop %v1078
    %v1095 = vmul.f32 %v1033, %v1079
    %v1096 = vmul.f32 %v1036, %v1080
    %v1097 = vmul.f32 %v1039, %v1081
    %v1098 = vmul.f32 %v1042, %v1082
    %v1099 = vmul.f32 %v1045, %v1083
    %v1100 = vmul.f32 %v1048, %v1084
    %v1101 = vmul.f32 %v1051, %v1085
    %v1102 = vmul.f32 %v1054, %v1086
    %v1103 = vmul.f32 %v1057, %v1087
    %v1104 = vmul.f32 %v1060, %v1088
    %v1105 = vmul.f32 %v1063, %v1089
    %v1106 = vmul.f32 %v1066, %v1090
    %v1107 = vmul.f32 %v1069, %v1091
    %v1108 = vmul.f32 %v1072, %v1092
    %v1109 = vmul.f32 %v1075, %v1093
    %v1110 = vmul.f32 %v1078, %v1094
    %v1111 = vsub.f32 2.0, %v1095
    %v1112 = vsub.f32 2.0, %v1096
    %v1113 = vsub.f32 2.0, %v1097
    %v1114 = vsub.f32 2.0, %v1098
    %v1115 = vsub.f32 2.0, %v1099
    %v1116 = vsub.f32 2.0, %v1100
    %v1117 = vsub.f32 2.0, %v1101
    %v1118 = vsub.f32 2.0, %v1102
    %v1119 = vsub.f32 2.0, %v1103
    %v1120 = vsub.f32 2.0, %v1104
    %v1121 = vsub.f32 2.0, %v1105
    %v1122 = vsub.f32 2.0, %v1106
    %v1123 = vsub.f32 2.0, %v1107
    %v1124 = vsub.f32 2.0, %v1108
    %v1125 = vsub.f32 2.0, %v1109
    %v1126 = vsub.f32 2.0, %v1110
    %v1127 = vmul.f32 %v1079, %v1111
    %v1128 = vmul.f32 %v1080, %v1112
    %v1129 = vmul.f32 %v1081, %v1113
    %v1130 = vmul.f32 %v1082, %v1114
    %v1131 = vmul.f32 %v1083, %v1115
    %v1132 = vmul.f32 %v1084, %v1116
    %v1133 = vmul.f32 %v1085, %v1117
    %v1134 = vmul.f32 %v1086, %v1118
    %v1135 = vmul.f32 %v1087, %v1119
    %v1136 = vmul.f32 %v1088, %v1120
    %v1137 = vmul.f32 %v1089, %v1121
    %v1138 = vmul.f32 %v1090, %v1122
    %v1139 = vmul.f32 %v1091, %v1123
    %v1140 = vmul.f32 %v1092, %v1124
    %v1141 = vmul.f32 %v1093, %v1125
    %v1142 = vmul.f32 %v1094, %v1126
    %v1143 = vmul.f32 %v968, %v1127
    %v1144 = vmul.f32 %v970, %v1127
    %v1145 = vmul.f32 %v972, %v1128
    %v1146 = vmul.f32 %v974, %v1128
    %v1147 = vmul.f32 %v976, %v1129
    %v1148 = vmul.f32 %v978, %v1129
    %v1149 = vmul.f32 %v980, %v1130
    %v1150 = vmul.f32 %v982, %v1130
    %v1151 = vmul.f32 %v984, %v1131
    %v1152 = vmul.f32 %v986, %v1131
    %v1153 = vmul.f32 %v988, %v1132
    %v1154 = vmul.f32 %v990, %v1132
    %v1155 = vmul.f32 %v992, %v1133
    %v1156 = vmul.f32 %v994, %v1133
    %v1157 = vmul.f32 %v996, %v1134
    %v1158 = vmul.f32 %v998, %v1134
    %v1159 = vmul.f32 %v1000, %v1135
    %v1160 = vmul.f32 %v1002, %v1135
    %v1161 = vmul.f32 %v1004, %v1136
    %v1162 = vmul.f32 %v1006, %v1136
    %v1163 = vmul.f32 %v1008, %v1137
    %v1164 = vmul.f32 %v1010, %v1137
    %v1165 = vmul.f32 %v1012, %v1138
    %v1166 = vmul.f32 %v1014, %v1138
    %v1167 = vmul.f32 %v1016, %v1139
    %v1168 = vmul.f32 %v1018, %v1139
    %v1169 = vmul.f32 %v1020, %v1140
    %v1170 = vmul.f32 %v1022, %v1140
    %v1171 = vmul.f32 %v1024, %v1141
    %v1172 = vmul.f32 %v1026, %v1141
    %v1173 = vmul.f32 %v1028, %v1142
    %v1174 = vmul.f32 %v1030, %v1142
    %1175 = vmatprep.subr.mxu0 0.0
    %1176 = vmatpush1.msra.mxu0 %v554
    %1177 = vmatprep.subr.mxu0 0.0
    %1178 = vmatpush1.msra.mxu0 %v555
    %1179 = vmatprep.subr.mxu0 0.0
    %1180 = vmatpush1.msra.mxu0 %v556
    %1181 = vmatprep.subr.mxu0 0.0
    %1182 = vmatpush1.msra.mxu0 %v557
    %1183 = vmatprep.subr.mxu0 0.0
    %1184 = vmatpush1.msra.mxu0 %v558
    %1185 = vmatprep.subr.mxu0 0.0
    %1186 = vmatpush1.msra.mxu0 %v559
    %1187 = vmatprep.subr.mxu0 0.0
    %1188 = vmatpush1.msra.mxu0 %v560
    %1189 = vmatprep.subr.mxu0 0.0
    %1190 = vmatpush1.msra.mxu0 %v561
    %1191 = vmatprep.subr.mxu0 0.0
    %1192 = vmatpush1.msra.mxu0 %v562
    %1193 = vmatprep.subr.mxu0 0.0
    %1194 = vmatpush1.msra.mxu0 %v563
    %1195 = vmatprep.subr.mxu0 0.0
    %1196 = vmatpush1.msra.mxu0 %v564
    %1197 = vmatprep.subr.mxu0 0.0
    %1198 = vmatpush1.msra.mxu0 %v565
    %1199 = vmatprep.subr.mxu0 0.0
    %1200 = vmatpush1.msra.mxu0 %v566
    %1201 = vmatprep.subr.mxu0 0.0
    %1202 = vmatpush1.msra.mxu0 %v567
    %1203 = vmatprep.subr.mxu0 0.0
    %1204 = vmatpush1.msra.mxu0 %v568
    %1205 = vmatprep.subr.mxu0 0.0
    %1206 = vmatpush1.msra.mxu0 %v569
    %1207 = vmatprep.subr.mxu0 0.0
    %1208 = vmatpush1.msra.mxu0 %v570
    %1209 = vmatprep.subr.mxu0 0.0
    %1210 = vmatpush1.msra.mxu0 %v571
    %1211 = vmatprep.subr.mxu0 0.0
    %1212 = vmatpush1.msra.mxu0 %v572
    %1213 = vmatprep.subr.mxu0 0.0
    %1214 = vmatpush1.msra.mxu0 %v573
    %1215 = vmatprep.subr.mxu0 0.0
    %1216 = vmatpush1.msra.mxu0 %v574
    %1217 = vmatprep.subr.mxu0 0.0
    %1218 = vmatpush1.msra.mxu0 %v575
    %1219 = vmatprep.subr.mxu0 0.0
    %1220 = vmatpush1.msra.mxu0 %v576
    %1221 = vmatprep.subr.mxu0 0.0
    %1222 = vmatpush1.msra.mxu0 %v577
    %1223 = vmatprep.subr.mxu0 0.0
    %1224 = vmatpush1.msra.mxu0 %v578
    %1225 = vmatprep.subr.mxu0 0.0
    %1226 = vmatpush1.msra.mxu0 %v579
    %1227 = vmatprep.subr.mxu0 0.0
    %1228 = vmatpush1.msra.mxu0 %v580
    %1229 = vmatprep.subr.mxu0 0.0
    %1230 = vmatpush1.msra.mxu0 %v581
    %1231 = vmatprep.subr.mxu0 0.0
    %1232 = vmatpush1.msra.mxu0 %v582
    %1233 = vmatprep.subr.mxu0 0.0
    %1234 = vmatpush1.msra.mxu0 %v583
    %1235 = vmatprep.subr.mxu0 0.0
    %1236 = vmatpush1.msra.mxu0 %v584
    %1237 = vmatprep.subr.mxu0 0.0
    %1238 = vmatpush1.msra.mxu0 %v585
    %1239 = vmatprep.mubr.f32.mxu0 %v1144
    %1240 = vmatmul.mubr.f32.gmra.mrb[0].mxu0 %v1143
    %v1241 = vpop.f32.mrb[0].mxu0
    %v1242 = vadd.f32 0.0, %v1241
    %v1243 = vpop.f32.mrb[0].mxu0
    %1244 = vmatprep.mubr.f32.mxu0 %v1146
    %1245 = vmatmul.mubr.f32.gmra.mrb[0].mxu0 %v1145
    %v1246 = vpop.f32.mrb[0].mxu0
    %v1247 = vadd.f32 0.0, %v1246
    %v1248 = vpop.f32.mrb[0].mxu0
    %1249 = vmatprep.mubr.f32.mxu0 %v1148
    %1250 = vmatmul.mubr.f32.gmra.mrb[0].mxu0 %v1147
    %v1251 = vpop.f32.mrb[0].mxu0
    %v1252 = vadd.f32 0.0, %v1251
    %v1253 = vpop.f32.mrb[0].mxu0
    %1254 = vmatprep.mubr.f32.mxu0 %v1150
    %1255 = vmatmul.mubr.f32.gmra.mrb[0].mxu0 %v1149
    %v1256 = vpop.f32.mrb[0].mxu0
    %v1257 = vadd.f32 0.0, %v1256
    %v1258 = vpop.f32.mrb[0].mxu0
    %1259 = vmatprep.mubr.f32.mxu0 %v1152
    %1260 = vmatmul.mubr.f32.gmra.mrb[0].mxu0 %v1151
    %v1261 = vpop.f32.mrb[0].mxu0
    %v1262 = vadd.f32 0.0, %v1261
    %v1263 = vpop.f32.mrb[0].mxu0
    %1264 = vmatprep.mubr.f32.mxu0 %v1154
    %1265 = vmatmul.mubr.f32.gmra.mrb[0].mxu0 %v1153
    %v1266 = vpop.f32.mrb[0].mxu0
    %v1267 = vadd.f32 0.0, %v1266
    %v1268 = vpop.f32.mrb[0].mxu0
    %1269 = vmatprep.mubr.f32.mxu0 %v1156
    %1270 = vmatmul.mubr.f32.gmra.mrb[0].mxu0 %v1155
    %v1271 = vpop.f32.mrb[0].mxu0
    %v1272 = vadd.f32 0.0, %v1271
    %v1273 = vpop.f32.mrb[0].mxu0
    %1274 = vmatprep.mubr.f32.mxu0 %v1158
    %1275 = vmatmul.mubr.f32.gmra.mrb[0].mxu0 %v1157
    %v1276 = vpop.f32.mrb[0].mxu0
    %v1277 = vadd.f32 0.0, %v1276
    %v1278 = vpop.f32.mrb[0].mxu0
    %1279 = vmatprep.mubr.f32.mxu0 %v1160
    %1280 = vmatmul.mubr.f32.gmra.mrb[0].mxu0 %v1159
    %v1281 = vpop.f32.mrb[0].mxu0
    %v1282 = vadd.f32 0.0, %v1281
    %v1283 = vpop.f32.mrb[0].mxu0
    %1284 = vmatprep.mubr.f32.mxu0 %v1162
    %1285 = vmatmul.mubr.f32.gmra.mrb[0].mxu0 %v1161
    %v1286 = vpop.f32.mrb[0].mxu0
    %v1287 = vadd.f32 0.0, %v1286
    %v1288 = vpop.f32.mrb[0].mxu0
    %1289 = vmatprep.mubr.f32.mxu0 %v1164
    %1290 = vmatmul.mubr.f32.gmra.mrb[0].mxu0 %v1163
    %v1291 = vpop.f32.mrb[0].mxu0
    %v1292 = vadd.f32 0.0, %v1291
    %v1293 = vpop.f32.mrb[0].mxu0
    %1294 = vmatprep.mubr.f32.mxu0 %v1166
    %1295 = vmatmul.mubr.f32.gmra.mrb[0].mxu0 %v1165
    %v1296 = vpop.f32.mrb[0].mxu0
    %v1297 = vadd.f32 0.0, %v1296
    %v1298 = vpop.f32.mrb[0].mxu0
    %1299 = vmatprep.mubr.f32.mxu0 %v1168
    %1300 = vmatmul.mubr.f32.gmra.mrb[0].mxu0 %v1167
    %v1301 = vpop.f32.mrb[0].mxu0
    %v1302 = vadd.f32 0.0, %v1301
    %v1303 = vpop.f32.mrb[0].mxu0
    %1304 = vmatprep.mubr.f32.mxu0 %v1170
    %1305 = vmatmul.mubr.f32.gmra.mrb[0].mxu0 %v1169
    %v1306 = vpop.f32.mrb[0].mxu0
    %v1307 = vadd.f32 0.0, %v1306
    %v1308 = vpop.f32.mrb[0].mxu0
    %1309 = vmatprep.mubr.f32.mxu0 %v1172
    %1310 = vmatmul.mubr.f32.gmra.mrb[0].mxu0 %v1171
    %v1311 = vpop.f32.mrb[0].mxu0
    %v1312 = vadd.f32 0.0, %v1311
    %v1313 = vpop.f32.mrb[0].mxu0
    %1314 = vmatprep.mubr.f32.mxu0 %v1174
    %1315 = vmatmul.mubr.f32.gmra.mrb[0].mxu0 %v1173
    %v1316 = vpop.f32.mrb[0].mxu0
    %v1317 = vadd.f32 0.0, %v1316
    %v1318 = vpop.f32.mrb[0].mxu0
    %1319 = vdwg.mxu0
    %v1320 = vadd.f32 %v1242, %v1262
    %v1321 = vadd.f32 %v1247, %v1267
    %v1322 = vadd.f32 %v1252, %v1272
    %v1323 = vadd.f32 %v1257, %v1277
    %v1324 = vadd.f32 %v1320, %v1282
    %v1325 = vadd.f32 %v1321, %v1287
    %v1326 = vadd.f32 %v1322, %v1292
    %v1327 = vadd.f32 %v1323, %v1297
    %v1328 = vadd.f32 %v1324, %v1302
    %v1329 = vadd.f32 %v1325, %v1307
    %v1330 = vadd.f32 %v1326, %v1312
    %v1331 = vadd.f32 %v1327, %v1317
    %v1332 = vlaneseq
    %v1333 = vshrl.u32 %v1332, 7
    %v1334 = vsub.s32 1, %v1333
    %v1335 = vrot.slane %v69, %v1334
    %1340 = vrot.lane.b32.xlu0 %v61, 32
    %v1341 = vpop.permute.xlu0 %1340
    %1342 = vrot.lane.b32.xlu0 %v62, 32
    %v1343 = vpop.permute.xlu0 %1342
    %1344 = vrot.lane.b32.xlu0 %v63, 32
    %v1345 = vpop.permute.xlu0 %1344
    %1346 = vrot.lane.b32.xlu0 %v64, 32
    %v1347 = vpop.permute.xlu0 %1346
    %1348 = vrot.lane.b32.xlu0 %v65, 32
    %v1349 = vpop.permute.xlu0 %1348
    %1350 = vrot.lane.b32.xlu0 %v66, 32
    %v1351 = vpop.permute.xlu0 %1350
    %1352 = vrot.lane.b32.xlu0 %v67, 32
    %v1353 = vpop.permute.xlu0 %1352
    %1354 = vrot.lane.b32.xlu0 %v68, 32
    %v1355 = vpop.permute.xlu0 %1354
    %v1356 = vsel %vm80, %v1341, %v1343
    %v1357 = vsel %vm80, %v1345, %v1347
    %v1358 = vsel %vm80, %v1349, %v1351
    %v1359 = vsel %vm80, %v1353, %v1355
    %1364 = vrot.lane.b32.xlu0 %v78, 32
    %v1365 = vpop.permute.xlu0 %1364
    %1366 = vrot.lane.b32.xlu0 %v1335, 32
    %v1367 = vpop.permute.xlu0 %1366
    %v1368 = vsel %vm80, %v1365, %v1367
    %v1371 = vsel %vm80, %v1328, 0
    %v1374 = vsel %vm80, %v1329, 0
    %v1377 = vsel %vm80, %v1330, 0
    %v1380 = vsel %vm80, %v1331, 0
    %1382 = vmatprep.subr.mxu0 0.0
    %1383 = vmatpush1.msra.mxu0 %v1356
    %1384 = vmatprep.subr.mxu0 0.0
    %1385 = vmatpush1.msra.mxu0 %v1357
    %1386 = vmatprep.subr.mxu0 0.0
    %1387 = vmatpush1.msra.mxu0 %v1358
    %1388 = vmatprep.subr.mxu0 0.0
    %1389 = vmatpush1.msra.mxu0 %v1359
    %1390 = vmatprep.subr.mxu0 0.0
    %1391 = vmatpush1.msra.mxu0 0.0
    %1392 = vmatprep.subr.mxu0 0.0
    %1393 = vmatpush1.msra.mxu0 0.0
    %1394 = vmatprep.subr.mxu0 0.0
    %1395 = vmatpush1.msra.mxu0 0.0
    %1396 = vmatprep.subr.mxu0 0.0
    %1397 = vmatpush1.msra.mxu0 0.0
    %1398 = vmatprep.subr.mxu0 0.0
    %1399 = vmatpush1.msra.mxu0 0.0
    %1400 = vmatprep.subr.mxu0 0.0
    %1401 = vmatpush1.msra.mxu0 0.0
    %1402 = vmatprep.subr.mxu0 0.0
    %1403 = vmatpush1.msra.mxu0 0.0
    %1404 = vmatprep.subr.mxu0 0.0
    %1405 = vmatpush1.msra.mxu0 0.0
    %1406 = vmatprep.subr.mxu0 0.0
    %1407 = vmatpush1.msra.mxu0 0.0
    %1408 = vmatprep.subr.mxu0 0.0
    %1409 = vmatpush1.msra.mxu0 0.0
    %1410 = vmatprep.subr.mxu0 0.0
    %1411 = vmatpush1.msra.mxu0 0.0
    %1412 = vmatprep.subr.mxu0 0.0
    %1413 = vmatpush1.msra.mxu0 0.0
    %1414 = vmatprep.subr.mxu0 0.0
    %1415 = vmatpush1.msra.mxu0 0.0
    %1416 = vmatprep.subr.mxu0 0.0
    %1417 = vmatpush1.msra.mxu0 0.0
    %1418 = vmatprep.subr.mxu0 0.0
    %1419 = vmatpush1.msra.mxu0 0.0
    %1420 = vmatprep.subr.mxu0 0.0
    %1421 = vmatpush1.msra.mxu0 0.0
    %1422 = vmatprep.subr.mxu0 0.0
    %1423 = vmatpush1.msra.mxu0 0.0
    %1424 = vmatprep.subr.mxu0 0.0
    %1425 = vmatpush1.msra.mxu0 0.0
    %1426 = vmatprep.subr.mxu0 0.0
    %1427 = vmatpush1.msra.mxu0 0.0
    %1428 = vmatprep.subr.mxu0 0.0
    %1429 = vmatpush1.msra.mxu0 0.0
    %1430 = vmatprep.subr.mxu0 0.0
    %1431 = vmatpush1.msra.mxu0 0.0
    %1432 = vmatprep.subr.mxu0 0.0
    %1433 = vmatpush1.msra.mxu0 0.0
    %1434 = vmatprep.subr.mxu0 0.0
    %1435 = vmatpush1.msra.mxu0 0.0
    %1436 = vmatprep.subr.mxu0 0.0
    %1437 = vmatpush1.msra.mxu0 0.0
    %1438 = vmatprep.subr.mxu0 0.0
    %1439 = vmatpush1.msra.mxu0 0.0
    %1440 = vmatprep.subr.mxu0 0.0
    %1441 = vmatpush1.msra.mxu0 0.0
    %1442 = vmatprep.subr.mxu0 0.0
    %1443 = vmatpush1.msra.mxu0 0.0
    %1444 = vmatprep.subr.mxu0 0.0
    %1445 = vmatpush1.msra.mxu0 0.0
    %1446 = vmatprep.mubr.f32.mxu0 0.0
    %1447 = vmatmul.mubr.f32.gmra.mrb[0].mxu0 %v1371
    %v1448 = vpop.f32.mrb[0].mxu0
    %v1449 = vadd.f32 %v1368, %v1448
    %v1450 = vpop.f32.mrb[0].mxu0
    %1451 = vmatprep.mubr.f32.mxu0 0.0
    %1452 = vmatmul.mubr.f32.gmra.mrb[0].mxu0 %v1374
    %v1453 = vpop.f32.mrb[0].mxu0
    %v1454 = vadd.f32 %v1368, %v1453
    %v1455 = vpop.f32.mrb[0].mxu0
    %1456 = vmatprep.mubr.f32.mxu0 0.0
    %1457 = vmatmul.mubr.f32.gmra.mrb[0].mxu0 %v1377
    %v1458 = vpop.f32.mrb[0].mxu0
    %v1459 = vadd.f32 %v1368, %v1458
    %v1460 = vpop.f32.mrb[0].mxu0
    %1461 = vmatprep.mubr.f32.mxu0 0.0
    %1462 = vmatmul.mubr.f32.gmra.mrb[0].mxu0 %v1380
    %v1463 = vpop.f32.mrb[0].mxu0
    %v1464 = vadd.f32 %v1368, %v1463
    %v1465 = vpop.f32.mrb[0].mxu0
    %1466 = vdwg.mxu0
    %1467 = vst [vmem:[#allocation7] sm:$0xff] %v1449
    %1468 = vst [vmem:[#allocation7 + $0x8] sm:$0xff] %v1454
    %1469 = vst [vmem:[#allocation7 + $0x10] sm:$0xff] %v1459
    %1470 = vst [vmem:[#allocation7 + $0x18] sm:$0xff] %v1464
    %v1471 = vld [vmem:[%s7] sm:$0xff]
    %v1472 = vld [vmem:[%s7 + $0x8] sm:$0xff]
    %v1473 = vld [vmem:[%s7 + $0x10] sm:$0xff]
    %v1474 = vld [vmem:[%s7 + $0x18] sm:$0xff]
    %v1475 = vld [vmem:[%s7 + $0x20] sm:$0xff]
    %v1476 = vld [vmem:[%s7 + $0x28] sm:$0xff]
    %v1477 = vld [vmem:[%s7 + $0x30] sm:$0xff]
    %v1478 = vld [vmem:[%s7 + $0x38] sm:$0xff]
    %v1479 = vld [vmem:[%s7 + $0x40] sm:$0xff]
    %v1480 = vld [vmem:[%s7 + $0x48] sm:$0xff]
    %v1481 = vld [vmem:[%s7 + $0x50] sm:$0xff]
    %v1482 = vld [vmem:[%s7 + $0x58] sm:$0xff]
    %v1483 = vld [vmem:[%s7 + $0x60] sm:$0xff]
    %v1484 = vld [vmem:[%s7 + $0x68] sm:$0xff]
    %v1485 = vld [vmem:[%s7 + $0x70] sm:$0xff]
    %v1486 = vld [vmem:[%s7 + $0x78] sm:$0xff]
    %v1487 = vld [vmem:[%s7 + $0x80] sm:$0xff]
    %v1488 = vld [vmem:[%s7 + $0x88] sm:$0xff]
    %v1489 = vld [vmem:[%s7 + $0x90] sm:$0xff]
    %v1490 = vld [vmem:[%s7 + $0x98] sm:$0xff]
    %v1491 = vld [vmem:[%s7 + $0xa0] sm:$0xff]
    %v1492 = vld [vmem:[%s7 + $0xa8] sm:$0xff]
    %v1493 = vld [vmem:[%s7 + $0xb0] sm:$0xff]
    %v1494 = vld [vmem:[%s7 + $0xb8] sm:$0xff]
    %v1495 = vld [vmem:[%s7 + $0xc0] sm:$0xff]
    %v1496 = vld [vmem:[%s7 + $0xc8] sm:$0xff]
    %v1497 = vld [vmem:[%s7 + $0xd0] sm:$0xff]
    %v1498 = vld [vmem:[%s7 + $0xd8] sm:$0xff]
    %v1499 = vld [vmem:[%s7 + $0xe0] sm:$0xff]
    %v1500 = vld [vmem:[%s7 + $0xe8] sm:$0xff]
    %v1501 = vld [vmem:[%s7 + $0xf0] sm:$0xff]
    %v1502 = vld [vmem:[%s7 + $0xf8] sm:$0xff]
    %1503 = vmatprep.subr.mxu0 0.0
    %1504 = vmatpush1.msra.mxu0 %v1471
    %1505 = vmatprep.subr.mxu0 0.0
    %1506 = vmatpush1.msra.mxu0 %v1472
    %1507 = vmatprep.subr.mxu0 0.0
    %1508 = vmatpush1.msra.mxu0 %v1473
    %1509 = vmatprep.subr.mxu0 0.0
    %1510 = vmatpush1.msra.mxu0 %v1474
    %1511 = vmatprep.subr.mxu0 0.0
    %1512 = vmatpush1.msra.mxu0 %v1475
    %1513 = vmatprep.subr.mxu0 0.0
    %1514 = vmatpush1.msra.mxu0 %v1476
    %1515 = vmatprep.subr.mxu0 0.0
    %1516 = vmatpush1.msra.mxu0 %v1477
    %1517 = vmatprep.subr.mxu0 0.0
    %1518 = vmatpush1.msra.mxu0 %v1478
    %1519 = vmatprep.subr.mxu0 0.0
    %1520 = vmatpush1.msra.mxu0 %v1479
    %1521 = vmatprep.subr.mxu0 0.0
    %1522 = vmatpush1.msra.mxu0 %v1480
    %1523 = vmatprep.subr.mxu0 0.0
    %1524 = vmatpush1.msra.mxu0 %v1481
    %1525 = vmatprep.subr.mxu0 0.0
    %1526 = vmatpush1.msra.mxu0 %v1482
    %1527 = vmatprep.subr.mxu0 0.0
    %1528 = vmatpush1.msra.mxu0 %v1483
    %1529 = vmatprep.subr.mxu0 0.0
    %1530 = vmatpush1.msra.mxu0 %v1484
    %1531 = vmatprep.subr.mxu0 0.0
    %1532 = vmatpush1.msra.mxu0 %v1485
    %1533 = vmatprep.subr.mxu0 0.0
    %1534 = vmatpush1.msra.mxu0 %v1486
    %1535 = vmatprep.subr.mxu0 0.0
    %1536 = vmatpush1.msra.mxu0 %v1487
    %1537 = vmatprep.subr.mxu0 0.0
    %1538 = vmatpush1.msra.mxu0 %v1488
    %1539 = vmatprep.subr.mxu0 0.0
    %1540 = vmatpush1.msra.mxu0 %v1489
    %1541 = vmatprep.subr.mxu0 0.0
    %1542 = vmatpush1.msra.mxu0 %v1490
    %1543 = vmatprep.subr.mxu0 0.0
    %1544 = vmatpush1.msra.mxu0 %v1491
    %1545 = vmatprep.subr.mxu0 0.0
    %1546 = vmatpush1.msra.mxu0 %v1492
    %1547 = vmatprep.subr.mxu0 0.0
    %1548 = vmatpush1.msra.mxu0 %v1493
    %1549 = vmatprep.subr.mxu0 0.0
    %1550 = vmatpush1.msra.mxu0 %v1494
    %1551 = vmatprep.subr.mxu0 0.0
    %1552 = vmatpush1.msra.mxu0 %v1495
    %1553 = vmatprep.subr.mxu0 0.0
    %1554 = vmatpush1.msra.mxu0 %v1496
    %1555 = vmatprep.subr.mxu0 0.0
    %1556 = vmatpush1.msra.mxu0 %v1497
    %1557 = vmatprep.subr.mxu0 0.0
    %1558 = vmatpush1.msra.mxu0 %v1498
    %1559 = vmatprep.subr.mxu0 0.0
    %1560 = vmatpush1.msra.mxu0 %v1499
    %1561 = vmatprep.subr.mxu0 0.0
    %1562 = vmatpush1.msra.mxu0 %v1500
    %1563 = vmatprep.subr.mxu0 0.0
    %1564 = vmatpush1.msra.mxu0 %v1501
    %1565 = vmatprep.subr.mxu0 0.0
    %1566 = vmatpush1.msra.mxu0 %v1502
    %1567 = vmatprep.mubr.f32.mxu0 %v1144
    %1568 = vmatmul.mubr.f32.gmra.mrb[0].mxu0 %v1143
    %v1569 = vpop.f32.mrb[0].mxu0
    %v1570 = vadd.f32 0.0, %v1569
    %v1571 = vpop.f32.mrb[0].mxu0
    %1572 = vmatprep.mubr.f32.mxu0 %v1146
    %1573 = vmatmul.mubr.f32.gmra.mrb[0].mxu0 %v1145
    %v1574 = vpop.f32.mrb[0].mxu0
    %v1575 = vadd.f32 0.0, %v1574
    %v1576 = vpop.f32.mrb[0].mxu0
    %1577 = vmatprep.mubr.f32.mxu0 %v1148
    %1578 = vmatmul.mubr.f32.gmra.mrb[0].mxu0 %v1147
    %v1579 = vpop.f32.mrb[0].mxu0
    %v1580 = vadd.f32 0.0, %v1579
    %v1581 = vpop.f32.mrb[0].mxu0
    %1582 = vmatprep.mubr.f32.mxu0 %v1150
    %1583 = vmatmul.mubr.f32.gmra.mrb[0].mxu0 %v1149
    %v1584 = vpop.f32.mrb[0].mxu0
    %v1585 = vadd.f32 0.0, %v1584
    %v1586 = vpop.f32.mrb[0].mxu0
    %1587 = vmatprep.mubr.f32.mxu0 %v1152
    %1588 = vmatmul.mubr.f32.gmra.mrb[0].mxu0 %v1151
    %v1589 = vpop.f32.mrb[0].mxu0
    %v1590 = vadd.f32 0.0, %v1589
    %v1591 = vpop.f32.mrb[0].mxu0
    %1592 = vmatprep.mubr.f32.mxu0 %v1154
    %1593 = vmatmul.mubr.f32.gmra.mrb[0].mxu0 %v1153
    %v1594 = vpop.f32.mrb[0].mxu0
    %v1595 = vadd.f32 0.0, %v1594
    %v1596 = vpop.f32.mrb[0].mxu0
    %1597 = vmatprep.mubr.f32.mxu0 %v1156
    %1598 = vmatmul.mubr.f32.gmra.mrb[0].mxu0 %v1155
    %v1599 = vpop.f32.mrb[0].mxu0
    %v1600 = vadd.f32 0.0, %v1599
    %v1601 = vpop.f32.mrb[0].mxu0
    %1602 = vmatprep.mubr.f32.mxu0 %v1158
    %1603 = vmatmul.mubr.f32.gmra.mrb[0].mxu0 %v1157
    %v1604 = vpop.f32.mrb[0].mxu0
    %v1605 = vadd.f32 0.0, %v1604
    %v1606 = vpop.f32.mrb[0].mxu0
    %1607 = vmatprep.mubr.f32.mxu0 %v1160
    %1608 = vmatmul.mubr.f32.gmra.mrb[0].mxu0 %v1159
    %v1609 = vpop.f32.mrb[0].mxu0
    %v1610 = vadd.f32 0.0, %v1609
    %v1611 = vpop.f32.mrb[0].mxu0
    %1612 = vmatprep.mubr.f32.mxu0 %v1162
    %1613 = vmatmul.mubr.f32.gmra.mrb[0].mxu0 %v1161
    %v1614 = vpop.f32.mrb[0].mxu0
    %v1615 = vadd.f32 0.0, %v1614
    %v1616 = vpop.f32.mrb[0].mxu0
    %1617 = vmatprep.mubr.f32.mxu0 %v1164
    %1618 = vmatmul.mubr.f32.gmra.mrb[0].mxu0 %v1163
    %v1619 = vpop.f32.mrb[0].mxu0
    %v1620 = vadd.f32 0.0, %v1619
    %v1621 = vpop.f32.mrb[0].mxu0
    %1622 = vmatprep.mubr.f32.mxu0 %v1166
    %1623 = vmatmul.mubr.f32.gmra.mrb[0].mxu0 %v1165
    %v1624 = vpop.f32.mrb[0].mxu0
    %v1625 = vadd.f32 0.0, %v1624
    %v1626 = vpop.f32.mrb[0].mxu0
    %1627 = vmatprep.mubr.f32.mxu0 %v1168
    %1628 = vmatmul.mubr.f32.gmra.mrb[0].mxu0 %v1167
    %v1629 = vpop.f32.mrb[0].mxu0
    %v1630 = vadd.f32 0.0, %v1629
    %v1631 = vpop.f32.mrb[0].mxu0
    %1632 = vmatprep.mubr.f32.mxu0 %v1170
    %1633 = vmatmul.mubr.f32.gmra.mrb[0].mxu0 %v1169
    %v1634 = vpop.f32.mrb[0].mxu0
    %v1635 = vadd.f32 0.0, %v1634
    %v1636 = vpop.f32.mrb[0].mxu0
    %1637 = vmatprep.mubr.f32.mxu0 %v1172
    %1638 = vmatmul.mubr.f32.gmra.mrb[0].mxu0 %v1171
    %v1639 = vpop.f32.mrb[0].mxu0
    %v1640 = vadd.f32 0.0, %v1639
    %v1641 = vpop.f32.mrb[0].mxu0
    %1642 = vmatprep.mubr.f32.mxu0 %v1174
    %1643 = vmatmul.mubr.f32.gmra.mrb[0].mxu0 %v1173
    %v1644 = vpop.f32.mrb[0].mxu0
    %v1645 = vadd.f32 0.0, %v1644
    %v1646 = vpop.f32.mrb[0].mxu0
    %1647 = vdwg.mxu0
    %v1648 = vadd.f32 %v1570, %v1590
    %v1649 = vadd.f32 %v1575, %v1595
    %v1650 = vadd.f32 %v1580, %v1600
    %v1651 = vadd.f32 %v1585, %v1605
    %v1652 = vadd.f32 %v1648, %v1610
    %v1653 = vadd.f32 %v1649, %v1615
    %v1654 = vadd.f32 %v1650, %v1620
    %v1655 = vadd.f32 %v1651, %v1625
    %v1656 = vadd.f32 %v1652, %v1630
    %v1657 = vadd.f32 %v1653, %v1635
    %v1658 = vadd.f32 %v1654, %v1640
    %v1659 = vadd.f32 %v1655, %v1645
    %v1660 = vmul.f32 %v1656, 0.25
    %v1661 = vmul.f32 %v1657, 0.25
    %v1662 = vmul.f32 %v1658, 0.25
    %v1663 = vmul.f32 %v1659, 0.25
    %1664 = vst [vmem:[#allocation8] sm:$0xff] %v1660
    %1665 = vst [vmem:[#allocation8 + $0x8] sm:$0xff] %v1661
    %1666 = vst [vmem:[#allocation8 + $0x10] sm:$0xff] %v1662
    %1667 = vst [vmem:[#allocation8 + $0x18] sm:$0xff] %v1663
    // Predicated region
    $region42: #{tpu_custom_call.1} parent=1 // pred_check
      _
    $region43: #{tpu_custom_call.1} parent=1 // pred_check_branch
      %1669 = sbr.rel (0) target = $region45
    $region44: #{tpu_custom_call.1} parent=1 // pred_region
      %s1671 = ssub.s32 512, 512
      %1672 = vsyncadd [#allocation4], %s1671
      %s1673 = sshll.u32 [#allocation7], 4
      %s1674 = int_to_ptr.vmem [resolvable:$true] %s1673
      %1679 = dma.vmem_to_hbm [thread:$0]  %s1674, 512, %s8, [#allocation4], 128, 128, 8
    $region45: #{tpu_custom_call.1} parent=1 // pred_fallthru
      _
    // Predicated region
    $region46: #{tpu_custom_call.1} parent=1 // pred_check
      _
    $region47: #{tpu_custom_call.1} parent=1 // pred_check_branch
      %1681 = sbr.rel (0) target = $region49
    $region48: #{tpu_custom_call.1} parent=1 // pred_region
      %s1683 = ssub.s32 512, 512
      %1684 = vsyncadd [#allocation9], %s1683
      %s1685 = sshll.u32 [#allocation8], 4
      %s1686 = int_to_ptr.vmem [resolvable:$true] %s1685
      %1691 = dma.vmem_to_hbm [thread:$0]  %s1686, 512, %s9, [#allocation9], 128, 128, 8
    $region49: #{tpu_custom_call.1} parent=1 // pred_fallthru
      _
    // Predicated region
    $region50: #{tpu_custom_call.1} parent=1 // pred_check
      _
    $region51: #{tpu_custom_call.1} parent=1 // pred_check_branch
      %1693 = sbr.rel (0) target = $region53
    $region52: #{tpu_custom_call.1} parent=1 // pred_region
      %1694 = dma.done [#allocation4], 512
    $region53: #{tpu_custom_call.1} parent=1 // pred_fallthru
      _
    // Predicated region
    $region54: #{tpu_custom_call.1} parent=1 // pred_check
      _
    $region55: #{tpu_custom_call.1} parent=1 // pred_check_branch
      %1696 = sbr.rel (0) target = $region57
    $region56: #{tpu_custom_call.1} parent=1 // pred_region
      %1697 = dma.done [#allocation9], 512
    $region57: #{tpu_custom_call.1} parent=1 // pred_fallthru
      _
    %1698 = vsyncpa [#allocation3], 1
    %1699 = vsyncpa [#allocation6], 1
    %1700 = vsyncpa [#allocation4], 1
    %1701 = vsyncpa [#allocation9], 1

</llo_original>
